<compile_context>
chip_gen: v6e
topology: v6e:2x2x1
jax: 0.10.0
libtpu: 0.0.40
codegen_flags: <defaults>
</compile_context>

<pallas_src>
import functools

import jax
import jax.numpy as jnp
from jax.experimental import pallas as pl
from jax.experimental.pallas import tpu as pltpu

C_IN = 320          # channels produced by EfficientNet-B0's last MBConv block
C_MID = 1280        # head 1x1-conv width (== _fc input features)
NUM_CLASSES = 4     # CornDiseaseClassifier default


def _round_up(x, m):
    return ((x + m - 1) // m) * m


def _effnet_head_kernel(x_ref, rid_ref, w_head_ref, bn_bias_ref, pooled_ref,
                        *, n_pad, silu_in_bf16):
    # Zero the per-split pooled accumulator on the first row-tile of this split.
    @pl.when(pl.program_id(1) == 0)
    def _():
        pooled_ref[...] = jnp.zeros_like(pooled_ref)

    # 1x1 head conv (BN scale already folded into the weight): bf16 MXU, f32 accum.
    h = jnp.dot(x_ref[...], w_head_ref[...],
                preferred_element_type=jnp.float32)              # (TM, C_MID) f32
    h = h + bn_bias_ref[...]                                     # BN bias only

    # SiLU.  bf16 keeps the sigmoid on the fast EUP path (v6e/v7x).
    if silu_in_bf16:
        h = h.astype(jnp.bfloat16)
    act = h * jax.nn.sigmoid(h)                                  # (TM, C_MID)

    # Per-batch segment sum of this tile: one-hot (n_pad, TM) @ (TM, C_MID) on MXU.
    # rid_ref holds the precomputed batch id of every row (no in-kernel int div).
    seg_ids = jax.lax.broadcasted_iota(jnp.int32, (n_pad, 1), 0)
    seg = (rid_ref[...] == seg_ids).astype(act.dtype)            # (n_pad, TM)
    pooled_ref[...] += jnp.dot(seg, act, preferred_element_type=jnp.float32)


def efficientnet_head(feat_nchw, w_head, bn_scale, bn_bias, w_fc, b_fc, *,
                      tm=1024, n_splits=2, silu_in_bf16=True):
    """feat_nchw: (N, 320, H, W) f32 backbone features -> (N, num_classes) logits."""
    n, c, h, w = feat_nchw.shape
    assert c == C_IN
    hw = h * w
    rows = n * hw
    num_classes = w_fc.shape[-1]

    # Row tile (multiple of 8 sublanes), padded so every split has whole tiles.
    tm = _round_up(max(8, min(tm, _round_up(rows, 8))), 8)
    tiles_total = n_splits * pl.cdiv(rows, n_splits * tm)
    rows_pad = tiles_total * tm
    tiles_per_split = tiles_total // n_splits
    n_pad = _round_up(max(n, 8), 8)                 # dense sublanes for the accumulator

    # Fold inference-BN scale into the head weight; keep only the bias in-kernel.
    w_head_b = (w_head.astype(jnp.float32)
                * bn_scale.reshape(1, C_MID).astype(jnp.float32)).astype(jnp.bfloat16)
    bn_bias_f = bn_bias.reshape(1, C_MID).astype(jnp.float32)

    # NCHW -> (N*HW, C_IN) bf16, zero-padded to a whole number of tiles.
    # TODO(synk): in a full model this transpose+cast would fuse into the backbone's
    #             last MBConv output instead of being a standalone HBM pass.
    x = jnp.transpose(feat_nchw, (0, 2, 3, 1)).reshape(rows, c).astype(jnp.bfloat16)
    x = jnp.pad(x, ((0, rows_pad - rows), (0, 0)))

    # Per-row batch id; padded rows map to ids >= n and land in discarded pooled rows.
    row_ids = (jnp.arange(rows_pad, dtype=jnp.int32) // hw).reshape(tiles_total, 1, tm)

    kernel = functools.partial(_effnet_head_kernel, n_pad=n_pad,
                               silu_in_bf16=silu_in_bf16)

    pooled_parts = pl.pallas_call(
        kernel,
        out_shape=jax.ShapeDtypeStruct((n_splits, n_pad, C_MID), jnp.float32),
        grid_spec=pltpu.PrefetchScalarGridSpec(
            num_scalar_prefetch=0,
            grid=(n_splits, tiles_per_split),
            in_specs=[
                pl.BlockSpec((tm, C_IN),
                             lambda p, s: (p * tiles_per_split + s, 0)),       # x rows
                pl.BlockSpec((None, 1, tm),
                             lambda p, s: (p * tiles_per_split + s, 0, 0)),    # batch ids
                pl.BlockSpec((C_IN, C_MID), lambda p, s: (0, 0)),              # w_head
                pl.BlockSpec((1, C_MID), lambda p, s: (0, 0)),                 # bn bias
            ],
            out_specs=pl.BlockSpec((None, n_pad, C_MID), lambda p, s: (p, 0, 0)),
        ),
        compiler_params=pltpu.CompilerParams(
            dimension_semantics=("parallel", "arbitrary"),
            vmem_limit_bytes=32 * 1024 * 1024,
        ),
        cost_estimate=pl.CostEstimate(
            flops=2 * rows_pad * C_IN * C_MID + 2 * rows_pad * n_pad * C_MID,
            transcendentals=rows_pad * C_MID,
            bytes_accessed=(x.size * 2 + w_head_b.size * 2 + row_ids.size * 4
                            + 2 * C_MID * 4 + n_splits * n_pad * C_MID * 4),
        ),
    )(x, row_ids, w_head_b, bn_bias_f)

    # Combine the per-split partial sums, take real batches, mean-scale + classifier
    # (dropout(0.2) is identity in eval).  Negligible FLOPs -> plain XLA.
    pooled = jnp.sum(pooled_parts, axis=0)[:n]                       # (N, C_MID) sums
    w_fc_scaled = w_fc.astype(jnp.float32) * (1.0 / hw)              # fold mean scale
    return pooled @ w_fc_scaled + b_fc.reshape(1, -1).astype(jnp.float32)[:, :num_classes]


def _kernel_dtype_reference(feat, w_head, bn_scale, bn_bias, w_fc, b_fc):
    """Mirrors the kernel's dtype choices (bf16 MXU inputs, bf16 SiLU, f32 accum)."""
    n, c, h, w = feat.shape
    hw = h * w
    x = jnp.transpose(feat, (0, 2, 3, 1)).reshape(n, hw, c).astype(jnp.bfloat16)
    wb = (w_head * bn_scale.reshape(1, -1)).astype(jnp.bfloat16)
    hh = jnp.einsum("nsc,cd->nsd", x, wb, preferred_element_type=jnp.float32)
    hh = hh + bn_bias.reshape(1, 1, -1)
    hb = hh.astype(jnp.bfloat16)
    act = (hb * jax.nn.sigmoid(hb)).astype(jnp.float32)
    pooled = jnp.sum(act, axis=1)
    return pooled @ (w_fc * (1.0 / hw)) + b_fc.reshape(1, -1)


def _reference_f32(feat, w_head, bn_scale, bn_bias, w_fc, b_fc):
    n, c, h, w = feat.shape
    x = jnp.transpose(feat, (0, 2, 3, 1)).reshape(n, h * w, c)
    hh = jnp.einsum("nsc,cd->nsd", x, w_head, preferred_element_type=jnp.float32)
    hh = hh * bn_scale.reshape(1, 1, -1) + bn_bias.reshape(1, 1, -1)
    hh = hh * jax.nn.sigmoid(hh)
    pooled = jnp.mean(hh, axis=1)
    return pooled @ w_fc + b_fc.reshape(1, -1)


if __name__ == "__main__":
    key = jax.random.PRNGKey(0)
    k_feat, k_wh, k_g, k_b, k_m, k_v, k_wfc, k_bfc = jax.random.split(key, 8)

    # Small feature map: what a 128x128 image gives after the stride-32 backbone.
    N, H, W = 2, 4, 4
    feat = jax.random.normal(k_feat, (N, C_IN, H, W), dtype=jnp.float32)

    # Head 1x1 conv weight stored (C_in, C_out) for matmul layout.
    w_head = jax.random.normal(k_wh, (C_IN, C_MID), dtype=jnp.float32) * 0.05
    # Inference BatchNorm folded into per-channel scale / bias.
    gamma = 1.0 + 0.1 * jax.random.normal(k_g, (1, C_MID), dtype=jnp.float32)
    beta = 0.1 * jax.random.normal(k_b, (1, C_MID), dtype=jnp.float32)
    rmean = 0.1 * jax.random.normal(k_m, (1, C_MID), dtype=jnp.float32)
    rvar = 0.5 + jnp.abs(jax.random.normal(k_v, (1, C_MID), dtype=jnp.float32))
    eps = 1e-3
    bn_scale = gamma / jnp.sqrt(rvar + eps)
    bn_bias = beta - rmean * bn_scale
    # The module's custom classifier: nn.Linear(1280, num_classes).
    w_fc = jax.random.normal(k_wfc, (C_MID, NUM_CLASSES), dtype=jnp.float32) * 0.03
    b_fc = 0.01 * jax.random.normal(k_bfc, (1, NUM_CLASSES), dtype=jnp.float32)

    # tm=8 so the (split, row-tile) grid is (2, 2) and cross-tile accumulation,
    # the per-batch segment matmul, and the per-split partial sums are exercised.
    logits = efficientnet_head(feat, w_head, bn_scale, bn_bias, w_fc, b_fc,
                               tm=8, n_splits=2, silu_in_bf16=True)
    logits = jax.block_until_ready(logits)
    assert logits.shape == (N, NUM_CLASSES)

    # Tight check vs a reference that mirrors the kernel's bf16 choices.
    ref_mirror = _kernel_dtype_reference(feat, w_head, bn_scale, bn_bias, w_fc, b_fc)
    assert jnp.allclose(logits, ref_mirror, atol=1e-2, rtol=1e-2)
    # Loose check vs the full-f32 reference (intentional bf16 precision trade).
    ref_f32 = _reference_f32(feat, w_head, bn_scale, bn_bias, w_fc, b_fc)
    assert jnp.allclose(logits, ref_f32, atol=5e-2, rtol=5e-2)

    print("KERNEL_OK")
</pallas_src>

<mosaic_0001>
module attributes {stable_mosaic.version = 11 : i64} {
  func.func @_effnet_head_kernel(%arg0: i32, %arg1: i32, %arg2: memref<8x320xbf16, #tpu.memory_space<vmem>>, %arg3: memref<1x1x8xi32, #tpu.memory_space<vmem>>, %arg4: memref<320x1280xbf16, #tpu.memory_space<vmem>>, %arg5: memref<1x1280xf32, #tpu.memory_space<vmem>>, %arg6: memref<1x8x1280xf32, #tpu.memory_space<vmem>>) attributes {dimension_semantics = [#tpu.dimension_semantics<parallel>, #tpu.dimension_semantics<arbitrary>], iteration_bounds = array<i64: 2, 2>, scalar_prefetch = 0 : i64, scratch_operands = 0 : i64, tpu.core_type = #tpu.core_type<tc>, window_params = [{transform_indices = @transform_0, window_bounds = array<i64: 8, 320>}, {transform_indices = @transform_1, window_bounds = array<i64: 1, 1, 8>}, {pipeline_mode = #tpu.pipeline_mode<synchronous>, transform_indices = @transform_2, window_bounds = array<i64: 320, 1280>}, {pipeline_mode = #tpu.pipeline_mode<synchronous>, transform_indices = @transform_3, window_bounds = array<i64: 1, 1280>}, {transform_indices = @transform_4, window_bounds = array<i64: 1, 8, 1280>}]} {
    %c0_i32 = arith.constant 0 : i32
    %0 = arith.cmpi eq, %arg1, %c0_i32 : i32
    %1 = arith.extui %0 : i1 to i32
    %c0_i32_0 = arith.constant 0 : i32
    %2 = arith.cmpi ne, %1, %c0_i32_0 : i32
    scf.if %2 {
      %cst_17 = arith.constant 0.000000e+00 : f32
      %32 = vector.broadcast %cst_17 : f32 to vector<8x1280xf32>
      %c0_18 = arith.constant 0 : index
      %c0_19 = arith.constant 0 : index
      %c0_20 = arith.constant 0 : index
      %33 = vector.load %arg6[%c0_18, %c0_19, %c0_20] : memref<1x8x1280xf32, #tpu.memory_space<vmem>>, vector<1x8x1280xf32>
      %34 = vector.shape_cast %33 : vector<1x8x1280xf32> to vector<8x1280xf32>
      %35 = vector.shape_cast %32 : vector<8x1280xf32> to vector<1x8x1280xf32>
      tpu.vector_store %arg6[%c0_18, %c0_19, %c0_20], %35 {strides = array<i32>} : memref<1x8x1280xf32, #tpu.memory_space<vmem>>, vector<1x8x1280xf32>,
    } else {
    }
    %c0 = arith.constant 0 : index
    %c0_1 = arith.constant 0 : index
    %3 = vector.load %arg2[%c0, %c0_1] : memref<8x320xbf16, #tpu.memory_space<vmem>>, vector<8x320xbf16>
    %c0_2 = arith.constant 0 : index
    %c0_3 = arith.constant 0 : index
    %4 = vector.load %arg4[%c0_2, %c0_3] : memref<320x1280xbf16, #tpu.memory_space<vmem>>, vector<320x1280xbf16>
    %cst = arith.constant dense<0.000000e+00> : vector<8x1280xf32>
    %5 = tpu.matmul %3, %4, %cst {dimension_numbers = #tpu.dot_dimension_numbers<[1], [0], [0], [1], [0, 0, 1, 1], [], []>} : vector<8x320xbf16>, vector<320x1280xbf16>, vector<8x1280xf32> -> vector<8x1280xf32>
    %c0_4 = arith.constant 0 : index
    %c0_5 = arith.constant 0 : index
    %6 = vector.load %arg5[%c0_4, %c0_5] : memref<1x1280xf32, #tpu.memory_space<vmem>>, vector<1x1280xf32>
    %7 = vector.broadcast %6 : vector<1x1280xf32> to vector<8x1280xf32>
    %8 = arith.addf %5, %7 : vector<8x1280xf32>
    %9 = arith.truncf %8 : vector<8x1280xf32> to vector<8x1280xbf16>
    %10 = arith.negf %9 : vector<8x1280xbf16>
    %11 = math.exp %10 : vector<8x1280xbf16>
    %cst_6 = arith.constant 1.000000e+00 : bf16
    %12 = vector.broadcast %cst_6 : bf16 to vector<8x1280xbf16>
    %13 = arith.addf %12, %11 : vector<8x1280xbf16>
    %14 = arith.divf %12, %13 : vector<8x1280xbf16>
    %15 = arith.mulf %9, %14 : vector<8x1280xbf16>
    %16 = tpu.iota {dimensions = array<i32: 0>} : vector<8x1xi32>
    %c0_7 = arith.constant 0 : index
    %c0_8 = arith.constant 0 : index
    %c0_9 = arith.constant 0 : index
    %17 = vector.load %arg3[%c0_7, %c0_8, %c0_9] : memref<1x1x8xi32, #tpu.memory_space<vmem>>, vector<1x1x8xi32>
    %18 = vector.shape_cast %17 : vector<1x1x8xi32> to vector<1x8xi32>
    %19 = vector.broadcast %18 : vector<1x8xi32> to vector<8x8xi32>
    %20 = vector.broadcast %16 : vector<8x1xi32> to vector<8x8xi32>
    %21 = arith.cmpi eq, %19, %20 : vector<8x8xi32>
    %22 = arith.extui %21 : vector<8x8xi1> to vector<8x8xi32>
    %23 = arith.sitofp %22 : vector<8x8xi32> to vector<8x8xf32>
    %24 = arith.truncf %23 : vector<8x8xf32> to vector<8x8xbf16>
    %c0_10 = arith.constant 0 : index
    %c0_11 = arith.constant 0 : index
    %c0_12 = arith.constant 0 : index
    %25 = vector.load %arg6[%c0_10, %c0_11, %c0_12] : memref<1x8x1280xf32, #tpu.memory_space<vmem>>, vector<1x8x1280xf32>
    %26 = vector.shape_cast %25 : vector<1x8x1280xf32> to vector<8x1280xf32>
    %cst_13 = arith.constant dense<0.000000e+00> : vector<8x1280xf32>
    %27 = tpu.matmul %24, %15, %cst_13 {dimension_numbers = #tpu.dot_dimension_numbers<[1], [0], [0], [1], [0, 0, 1, 1], [], []>} : vector<8x8xbf16>, vector<8x1280xbf16>, vector<8x1280xf32> -> vector<8x1280xf32>
    %28 = arith.addf %26, %27 : vector<8x1280xf32>
    %c0_14 = arith.constant 0 : index
    %c0_15 = arith.constant 0 : index
    %c0_16 = arith.constant 0 : index
    %29 = vector.load %arg6[%c0_14, %c0_15, %c0_16] : memref<1x8x1280xf32, #tpu.memory_space<vmem>>, vector<1x8x1280xf32>
    %30 = vector.shape_cast %29 : vector<1x8x1280xf32> to vector<8x1280xf32>
    %31 = vector.shape_cast %28 : vector<8x1280xf32> to vector<1x8x1280xf32>
    tpu.vector_store %arg6[%c0_14, %c0_15, %c0_16], %31 {strides = array<i32>} : memref<1x8x1280xf32, #tpu.memory_space<vmem>>, vector<1x8x1280xf32>,
    return
  }
  func.func @transform_0(%arg0: i32, %arg1: i32) -> (i32, i32) {
    %c2_i32 = arith.constant 2 : i32
    %0 = arith.muli %arg0, %c2_i32 : i32
    %1 = arith.addi %0, %arg1 : i32
    %c0_i32 = arith.constant 0 : i32
    %c0_i32_0 = arith.constant 0 : i32
    return %1, %c0_i32 : i32, i32
  }
  func.func @transform_1(%arg0: i32, %arg1: i32) -> (i32, i32, i32) {
    %c2_i32 = arith.constant 2 : i32
    %0 = arith.muli %arg0, %c2_i32 : i32
    %1 = arith.addi %0, %arg1 : i32
    %c0_i32 = arith.constant 0 : i32
    %c0_i32_0 = arith.constant 0 : i32
    %c0_i32_1 = arith.constant 0 : i32
    return %1, %c0_i32, %c0_i32_0 : i32, i32, i32
  }
  func.func @transform_2(%arg0: i32, %arg1: i32) -> (i32, i32) {
    %c0_i32 = arith.constant 0 : i32
    %c0_i32_0 = arith.constant 0 : i32
    %c0_i32_1 = arith.constant 0 : i32
    return %c0_i32, %c0_i32_0 : i32, i32
  }
  func.func @transform_3(%arg0: i32, %arg1: i32) -> (i32, i32) {
    %c0_i32 = arith.constant 0 : i32
    %c0_i32_0 = arith.constant 0 : i32
    %c0_i32_1 = arith.constant 0 : i32
    return %c0_i32, %c0_i32_0 : i32, i32
  }
  func.func @transform_4(%arg0: i32, %arg1: i32) -> (i32, i32, i32) {
    %c0_i32 = arith.constant 0 : i32
    %c0_i32_0 = arith.constant 0 : i32
    %c0_i32_1 = arith.constant 0 : i32
    return %arg0, %c0_i32, %c0_i32_0 : i32, i32, i32
  }
}

</mosaic_0001>

<llo_original>
// kernel: tpu_custom_call.1
$region0: #{tpu_custom_call.1}
  #allocation0 [shape = 'u32[]', space=smem, size = 0x4, offset = 0x4, fixed_abs, tag = 'smem constant byte address 0x4 - core index']
  #allocation1 [shape = 'u32[144,128]{1,0:T(1,128)}', space=vmem, size = 0x12000, scoped, tag = 'internal scratch']
  %s0 = inlined_call_operand.hbm [shape: bf16[32,320], index: 0, kind: input, shape index: {}]
  %s1 = inlined_call_operand.hbm [shape: s32[4,1,8], index: 1, kind: input, shape index: {}]
  %s2 = inlined_call_operand.hbm [shape: bf16[320,1280], index: 2, kind: input, shape index: {}]
  %s3 = inlined_call_operand.hbm [shape: f32[1,1280], index: 3, kind: input, shape index: {}]
  %s4 = inlined_call_operand.hbm [shape: f32[2,8,1280], index: 4, kind: output, shape index: {}]
  %s5 = sld [smem:[#allocation0]]
  $region69: #{tpu_custom_call.1} parent=0
    _
  %s7 = ssub.s32 1, %s5
  %s8 = scalar_select 0, %s7, %s5
  $region1: #{tpu_custom_call.1} parent=0
    #allocation2 [shape = 'u8[12288]{0}', space=vmem, size = 0x3000, scoped, tag = 'input window, operand 0']
    #allocation3 [shape = 's32[2]{0}', space=sflag, size = 0x8, scoped, tag = 'scoped memory for tpu_custom_call.1']
    #allocation4 [shape = 's32[2]{0}', space=sflag, size = 0x8, scoped, tag = 'scoped memory for tpu_custom_call.1']
    #allocation5 [shape = 'u8[1024]{0}', space=vmem, size = 0x400, scoped, tag = 'input window, operand 1']
    #allocation6 [shape = 's32[2]{0}', space=sflag, size = 0x8, scoped, tag = 'scoped memory for tpu_custom_call.1']
    #allocation7 [shape = 'u8[819200]{0}', space=vmem, size = 0xc8000, scoped, tag = 'input window, operand 2, single buffered']
    #allocation8 [shape = 'u8[5120]{0}', space=vmem, size = 0x1400, scoped, tag = 'input window, operand 3, single buffered']
    #allocation9 [shape = 's32[1]{0}', space=sflag, size = 0x4, scoped, tag = 'scoped memory for tpu_custom_call.1']
    #allocation10 [shape = 'u8[81920]{0}', space=vmem, size = 0x14000, scoped, tag = 'output window, operand 0']
    %9 = vsyncpa [#allocation3], 0
    %s10 = scalar_lea.sflag [#allocation3], 1
    %11 = vsyncpa %s10, 0
    %12 = vsyncpa [#allocation6], 0
    %s13 = scalar_lea.sflag [#allocation6], 1
    %14 = vsyncpa %s13, 0
    %15 = vsyncpa [#allocation9], 0
    %16 = vsyncpa [#allocation4], 0
    %s17 = scalar_lea.sflag [#allocation4], 1
    %18 = vsyncpa %s17, 0
    loop: start=0, step=1, limit=6
    $region2: #{tpu_custom_call.1} parent=1 // loop_pre_header
      _
    $region3: #{tpu_custom_call.1} parent=1 // loop_header
      %s20 = sphi 0, %s24
      %p21 = scmp.ge.s32.totalorder %s20, 6
      %s27 = sphi 0, %s39
      %s28 = sphi 0, %s35
      %s29 = sphi 0, %s27
      %s30 = sphi 0, %s28
      %s31 = sphi 0, %s29
      %s32 = sphi 0, %s30
      %s46 = sphi 0, %s48
      %s49 = sphi 0, %s46
      %s50 = sphi 0, %s49
      %s66 = sphi 0, %s50
      %s76 = sphi 0, %s78
      %s79 = sphi 0, %s76
      %s80 = sphi 0, %s79
      %s96 = sphi 0, %s80
      %s100 = sphi 0, %s100
      %s102 = sphi 0, %s100
      %s103 = sphi 0, %s102
      %s117 = sphi 0, %s103
      %s121 = sphi 0, %s121
      %s123 = sphi 0, %s121
      %s124 = sphi 0, %s123
      %s138 = sphi 0, %s124
      %s144 = sphi 0, %s146
      %s147 = sphi 0, %s144
      %s148 = sphi 0, %s147
      %s164 = sphi 0, %s148
    $region4: #{tpu_custom_call.1} parent=1 // loop_header_branch
      %23 = sbr.rel (%p21) target = $region8
    $region5: #{tpu_custom_call.1} parent=1 // loop_body
      %s25 = ssub.s32 %s20, 1
      %s26 = ssub.s32 %s20, 2
      %s33 = sadd.s32 1, %s28
      %p34 = scmp.ge.s32.totalorder %s33, 2
      %s35 = scalar_select %p34, 0, %s33
      %s36 = sadd.s32 1, %s27
      %s37 = scalar_select %p34, %s36, %s27
      %p38 = scmp.ge.s32.totalorder %s37, 2
      %s39 = scalar_select %p38, 0, %s37
      %s40 = smul.u32 %s27, 2
      %s41 = sadd.s32 %s40, %s28
      %s42 = smul.u32 %s39, 2
      %s43 = sadd.s32 %s42, %s35
      %s44 = ssub.s32 %s41, %s43
      %p45 = scmp.eq.s32.totalorder %s44, 0
      %s47 = sadd.s32 %s46, 1
      %s48 = scalar_select %p45, %s46, %s47
      %p51 = pneg %p45
      %p52 = scmp.eq.s32.totalorder %s20, 3
      %p53 = por %p51, %p52
      %p54 = scmp.ne.s32.totalorder %s46, %s49
      %p55 = scmp.eq.s32.totalorder %s20, 0
      %p56 = por %p54, %p55
      %p57 = scmp.ne.s32.totalorder %s46, %s49
      %p58 = scmp.eq.s32.totalorder %s25, 3
      %p59 = por %p57, %p58
      %p60 = scmp.ne.s32.totalorder %s49, %s50
      %p61 = scmp.eq.s32.totalorder %s25, 0
      %p62 = por %p60, %p61
      %p63 = scmp.ne.s32.totalorder %s49, %s50
      %p64 = scmp.eq.s32.totalorder %s26, 3
      %p65 = por %p63, %p64
      %p67 = scmp.ne.s32.totalorder %s50, %s66
      %p68 = scmp.eq.s32.totalorder %s26, 0
      %p69 = por %p67, %p68
      %s70 = smul.u32 %s27, 2
      %s71 = sadd.s32 %s70, %s28
      %s72 = smul.u32 %s39, 2
      %s73 = sadd.s32 %s72, %s35
      %s74 = ssub.s32 %s71, %s73
      %p75 = scmp.eq.s32.totalorder %s74, 0
      %s77 = sadd.s32 %s76, 1
      %s78 = scalar_select %p75, %s76, %s77
      %p81 = pneg %p75
      %p82 = scmp.eq.s32.totalorder %s20, 3
      %p83 = por %p81, %p82
      %p84 = scmp.ne.s32.totalorder %s76, %s79
      %p85 = scmp.eq.s32.totalorder %s20, 0
      %p86 = por %p84, %p85
      %p87 = scmp.ne.s32.totalorder %s76, %s79
      %p88 = scmp.eq.s32.totalorder %s25, 3
      %p89 = por %p87, %p88
      %p90 = scmp.ne.s32.totalorder %s79, %s80
      %p91 = scmp.eq.s32.totalorder %s25, 0
      %p92 = por %p90, %p91
      %p93 = scmp.ne.s32.totalorder %s79, %s80
      %p94 = scmp.eq.s32.totalorder %s26, 3
      %p95 = por %p93, %p94
      %p97 = scmp.ne.s32.totalorder %s80, %s96
      %p98 = scmp.eq.s32.totalorder %s26, 0
      %p99 = por %p97, %p98
      %s101 = sadd.s32 %s100, 1
      %p104 = scmp.eq.s32.totalorder %s20, 3
      %p105 = scmp.ne.s32.totalorder %s100, %s102
      %p106 = scmp.eq.s32.totalorder %s20, 0
      %p107 = por %p105, %p106
      %p108 = scmp.ne.s32.totalorder %s100, %s102
      %p109 = scmp.eq.s32.totalorder %s25, 3
      %p110 = por %p108, %p109
      %p111 = scmp.ne.s32.totalorder %s102, %s103
      %p112 = scmp.eq.s32.totalorder %s25, 0
      %p113 = por %p111, %p112
      %p114 = scmp.ne.s32.totalorder %s102, %s103
      %p115 = scmp.eq.s32.totalorder %s26, 3
      %p116 = por %p114, %p115
      %p118 = scmp.ne.s32.totalorder %s103, %s117
      %p119 = scmp.eq.s32.totalorder %s26, 0
      %p120 = por %p118, %p119
      %s122 = sadd.s32 %s121, 1
      %p125 = scmp.eq.s32.totalorder %s20, 3
      %p126 = scmp.ne.s32.totalorder %s121, %s123
      %p127 = scmp.eq.s32.totalorder %s20, 0
      %p128 = por %p126, %p127
      %p129 = scmp.ne.s32.totalorder %s121, %s123
      %p130 = scmp.eq.s32.totalorder %s25, 3
      %p131 = por %p129, %p130
      %p132 = scmp.ne.s32.totalorder %s123, %s124
      %p133 = scmp.eq.s32.totalorder %s25, 0
      %p134 = por %p132, %p133
      %p135 = scmp.ne.s32.totalorder %s123, %s124
      %p136 = scmp.eq.s32.totalorder %s26, 3
      %p137 = por %p135, %p136
      %p139 = scmp.ne.s32.totalorder %s124, %s138
      %p140 = scmp.eq.s32.totalorder %s26, 0
      %p141 = por %p139, %p140
      %s142 = ssub.s32 %s27, %s39
      %p143 = scmp.eq.s32.totalorder %s142, 0
      %s145 = sadd.s32 %s144, 1
      %s146 = scalar_select %p143, %s144, %s145
      %p149 = pneg %p143
      %p150 = scmp.eq.s32.totalorder %s20, 3
      %p151 = por %p149, %p150
      %p152 = scmp.ne.s32.totalorder %s144, %s147
      %p153 = scmp.eq.s32.totalorder %s20, 0
      %p154 = por %p152, %p153
      %p155 = scmp.ne.s32.totalorder %s144, %s147
      %p156 = scmp.eq.s32.totalorder %s25, 3
      %p157 = por %p155, %p156
      %p158 = scmp.ne.s32.totalorder %s147, %s148
      %p159 = scmp.eq.s32.totalorder %s25, 0
      %p160 = por %p158, %p159
      %p161 = scmp.ne.s32.totalorder %s147, %s148
      %p162 = scmp.eq.s32.totalorder %s26, 3
      %p163 = por %p161, %p162
      %p165 = scmp.ne.s32.totalorder %s148, %s164
      %p166 = scmp.eq.s32.totalorder %s26, 0
      %p167 = por %p165, %p166
      %p168 = scmp.le.s32.totalorder 1, %s20
      %p169 = scmp.lt.s32.totalorder %s20, 5
      %p170 = pnand %p168, %p169
      %p171 = pneg %p170
      // Predicated region
      $region9: #{tpu_custom_call.1} parent=5 // pred_check
        _
      $region10: #{tpu_custom_call.1} parent=5 // pred_check_branch
        %173 = sbr.rel (%p170) target = $region12
      $region11: #{tpu_custom_call.1} parent=5 // pred_region
        %s174 = ssub.s32 %s20, 1
        // Predicated region
        $region13: #{tpu_custom_call.1} parent=11 // pred_check
          %p175 = pneg %p113
        $region14: #{tpu_custom_call.1} parent=11 // pred_check_branch
          %177 = sbr.rel (%p175) target = $region16
        $region15: #{tpu_custom_call.1} parent=11 // pred_region
          %s179 = ssub.s32 25600, 25600
          %180 = vsyncadd [#allocation6], %s179
          %s181 = sshll.u32 [#allocation7], 4
          %s182 = int_to_ptr.vmem [resolvable:$true] %s181
          %187 = dma.hbm_to_vmem [thread:$0]  %s2, 25600, %s182, [#allocation6], 640, 640, 40
        $region16: #{tpu_custom_call.1} parent=11 // pred_fallthru
          _
        // Predicated region
        $region17: #{tpu_custom_call.1} parent=11 // pred_check
          %p188 = pneg %p134
        $region18: #{tpu_custom_call.1} parent=11 // pred_check_branch
          %190 = sbr.rel (%p188) target = $region20
        $region19: #{tpu_custom_call.1} parent=11 // pred_region
          %s192 = ssub.s32 160, 160
          %193 = vsyncadd [#allocation9], %s192
          %s195 = sshll.u32 [#allocation8], 4
          %s196 = int_to_ptr.vmem [resolvable:$true] %s195
          %198 = dma.hbm_to_vmem [thread:$0]  %s3, 160, %s196, [#allocation9]
        $region20: #{tpu_custom_call.1} parent=11 // pred_fallthru
          _
      $region12: #{tpu_custom_call.1} parent=5 // pred_fallthru
        _
      %p199 = scmp.lt.s32.totalorder %s20, 4
      // Predicated region
      $region21: #{tpu_custom_call.1} parent=5 // pred_check
        %p200 = pneg %p199
      $region22: #{tpu_custom_call.1} parent=5 // pred_check_branch
        %202 = sbr.rel (%p200) target = $region24
      $region23: #{tpu_custom_call.1} parent=5 // pred_region
        // Predicated region
        $region25: #{tpu_custom_call.1} parent=23 // pred_check
          %p203 = pneg %p56
        $region26: #{tpu_custom_call.1} parent=23 // pred_check_branch
          %205 = sbr.rel (%p203) target = $region28
        $region27: #{tpu_custom_call.1} parent=23 // pred_region
          %s206 = sand.u32 %s46, 1
          %s207 = scalar_lea.sflag [#allocation3], %s206
          %s208 = sand.u32 %s46, 1
          %s209 = smul.addr %s208, 12
          %s210 = scalar_lea.vmem [#allocation2], %s209
          %s211 = smul.u32 %s27, 2
          %s212 = sadd.s32 %s211, %s28
          %s214 = ssub.s32 192, 192
          %215 = vsyncadd %s207, %s214
          %s216 = smul.addr %s212, 3
          %s217 = smul.addr %s216, 64
          %s218 = scalar_lea.hbm %s0, %s217
          %s220 = sshll.u32 %s210, 4
          %s221 = int_to_ptr.vmem [resolvable:$true] %s220
          %223 = dma.hbm_to_vmem [thread:$0]  %s218, 192, %s221, %s207
        $region28: #{tpu_custom_call.1} parent=23 // pred_fallthru
          _
        // Predicated region
        $region29: #{tpu_custom_call.1} parent=23 // pred_check
          %p224 = pneg %p86
        $region30: #{tpu_custom_call.1} parent=23 // pred_check_branch
          %226 = sbr.rel (%p224) target = $region32
        $region31: #{tpu_custom_call.1} parent=23 // pred_region
          %s227 = sand.u32 %s20, 1
          %s228 = scalar_lea.sflag [#allocation6], %s227
          %s229 = sand.u32 %s76, 1
          %s230 = scalar_lea.vmem [#allocation5], %s229
          %s231 = smul.u32 %s27, 2
          %s232 = sadd.s32 %s231, %s28
          %s234 = ssub.s32 16, 16
          %235 = vsyncadd %s228, %s234
          %s236 = smul.addr %s232, 16
          %s237 = scalar_lea.hbm %s1, %s236
          %s239 = sshll.u32 %s230, 4
          %s240 = int_to_ptr.vmem [resolvable:$true] %s239
          %242 = dma.hbm_to_vmem [thread:$0]  %s237, 16, %s240, %s228
        $region32: #{tpu_custom_call.1} parent=23 // pred_fallthru
          _
      $region24: #{tpu_custom_call.1} parent=5 // pred_fallthru
        _
      %p243 = scmp.le.s32.totalorder 1, %s20
      %p244 = scmp.lt.s32.totalorder %s20, 5
      %p245 = pnand %p243, %p244
      %p246 = pneg %p245
      // Predicated region
      $region33: #{tpu_custom_call.1} parent=5 // pred_check
        _
      $region34: #{tpu_custom_call.1} parent=5 // pred_check_branch
        %248 = sbr.rel (%p245) target = $region36
      $region35: #{tpu_custom_call.1} parent=5 // pred_region
        %s249 = ssub.s32 %s20, 1
        %s250 = sand.u32 %s49, 1
        %s251 = scalar_lea.sflag [#allocation3], %s250
        %s252 = sand.u32 %s49, 1
        %s253 = smul.addr %s252, 12
        %s254 = scalar_lea.vmem [#allocation2], %s253
        // Predicated region
        $region37: #{tpu_custom_call.1} parent=35 // pred_check
          %p255 = pneg %p62
        $region38: #{tpu_custom_call.1} parent=35 // pred_check_branch
          %257 = sbr.rel (%p255) target = $region40
        $region39: #{tpu_custom_call.1} parent=35 // pred_region
          %258 = dma.done %s251, 192
        $region40: #{tpu_custom_call.1} parent=35 // pred_fallthru
          _
        %s259 = sand.u32 %s25, 1
        %s260 = scalar_lea.sflag [#allocation6], %s259
        %s261 = sand.u32 %s79, 1
        %s262 = scalar_lea.vmem [#allocation5], %s261
        // Predicated region
        $region41: #{tpu_custom_call.1} parent=35 // pred_check
          %p263 = pneg %p92
        $region42: #{tpu_custom_call.1} parent=35 // pred_check_branch
          %265 = sbr.rel (%p263) target = $region44
        $region43: #{tpu_custom_call.1} parent=35 // pred_region
          %266 = dma.done %s260, 16
        $region44: #{tpu_custom_call.1} parent=35 // pred_fallthru
          _
        // Predicated region
        $region45: #{tpu_custom_call.1} parent=35 // pred_check
          %p267 = pneg %p113
        $region46: #{tpu_custom_call.1} parent=35 // pred_check_branch
          %269 = sbr.rel (%p267) target = $region48
        $region47: #{tpu_custom_call.1} parent=35 // pred_region
          %270 = dma.done [#allocation6], 25600
        $region48: #{tpu_custom_call.1} parent=35 // pred_fallthru
          _
        // Predicated region
        $region49: #{tpu_custom_call.1} parent=35 // pred_check
          %p271 = pneg %p134
        $region50: #{tpu_custom_call.1} parent=35 // pred_check_branch
          %273 = sbr.rel (%p271) target = $region52
        $region51: #{tpu_custom_call.1} parent=35 // pred_region
          %274 = dma.done [#allocation9], 160
        $region52: #{tpu_custom_call.1} parent=35 // pred_fallthru
          _
        %s275 = sand.u32 %s49, 1
        %s276 = scalar_lea.sflag [#allocation3], %s275
        %s277 = sand.u32 %s49, 1
        %s278 = smul.addr %s277, 12
        %s279 = scalar_lea.vmem [#allocation2], %s278
        %p280 = pneg %p62
        %p281 = pneg %p59
        %s282 = sand.u32 %s25, 1
        %s283 = scalar_lea.sflag [#allocation6], %s282
        %s284 = sand.u32 %s79, 1
        %s285 = scalar_lea.vmem [#allocation5], %s284
        %p286 = pneg %p92
        %p287 = pneg %p89
        %p288 = pneg %p113
        %p289 = pneg %p110
        %p290 = pneg %p134
        %p291 = pneg %p131
        %p292 = pneg %p160
        %p293 = pneg %p157
        %s294 = sand.u32 %s147, 1
        %s295 = scalar_lea.sflag [#allocation4], %s294
        %s296 = sand.u32 %s147, 1
        %s297 = smul.addr %s296, 80
        %s298 = scalar_lea.vmem [#allocation10], %s297
        %s299 = smul.u32 %s29, 2
        %s300 = sadd.s32 %s299, %s30
        %s301 = smul.u32 %s29, 2
        %s302 = sadd.s32 %s301, %s30
        %p305 = scmp.eq.s32.totalorder %s30, 0
        // Predicated region
        $region53: #{tpu_custom_call.1} parent=35 // pred_check
          %p306 = pneg %p305
        $region54: #{tpu_custom_call.1} parent=35 // pred_check_branch
          %308 = sbr.rel (%p306) target = $region56
        $region55: #{tpu_custom_call.1} parent=35 // pred_region
          %309 = vst [vmem:[%s298] sm:$0xff] 0.0
          %310 = vst [vmem:[%s298 + $0x8] sm:$0xff] 0.0
          %311 = vst [vmem:[%s298 + $0x10] sm:$0xff] 0.0
          %312 = vst [vmem:[%s298 + $0x18] sm:$0xff] 0.0
          %313 = vst [vmem:[%s298 + $0x20] sm:$0xff] 0.0
          %314 = vst [vmem:[%s298 + $0x28] sm:$0xff] 0.0
          %315 = vst [vmem:[%s298 + $0x30] sm:$0xff] 0.0
          %316 = vst [vmem:[%s298 + $0x38] sm:$0xff] 0.0
          %317 = vst [vmem:[%s298 + $0x40] sm:$0xff] 0.0
          %318 = vst [vmem:[%s298 + $0x48] sm:$0xff] 0.0
        $region56: #{tpu_custom_call.1} parent=35 // pred_fallthru
          _
        %v319 = vld [vmem:[%s254] sm:$0xff]
        %v320 = vld [vmem:[%s254 + $0x8] sm:$0xf]
        %v321 = vld [vmem:[#allocation7] sm:$0xff]
        %v322 = vld [vmem:[#allocation7 + $0x8] sm:$0xff]
        %v323 = vld [vmem:[#allocation7 + $0x10] sm:$0xff]
        %v324 = vld [vmem:[#allocation7 + $0x18] sm:$0xff]
        %v325 = vld [vmem:[#allocation7 + $0x20] sm:$0xff]
        %v326 = vld [vmem:[#allocation7 + $0x28] sm:$0xff]
        %v327 = vld [vmem:[#allocation7 + $0x30] sm:$0xff]
        %v328 = vld [vmem:[#allocation7 + $0x38] sm:$0xff]
        %v329 = vld [vmem:[#allocation7 + $0x40] sm:$0xff]
        %v330 = vld [vmem:[#allocation7 + $0x48] sm:$0xff]
        %v331 = vld [vmem:[#allocation7 + $0x50] sm:$0xff]
        %v332 = vld [vmem:[#allocation7 + $0x58] sm:$0xff]
        %v333 = vld [vmem:[#allocation7 + $0x60] sm:$0xff]
        %v334 = vld [vmem:[#allocation7 + $0x68] sm:$0xff]
        %v335 = vld [vmem:[#allocation7 + $0x70] sm:$0xff]
        %v336 = vld [vmem:[#allocation7 + $0x78] sm:$0xff]
        %v337 = vld [vmem:[#allocation7 + $0x80] sm:$0xff]
        %v338 = vld [vmem:[#allocation7 + $0x88] sm:$0xff]
        %v339 = vld [vmem:[#allocation7 + $0x90] sm:$0xff]
        %v340 = vld [vmem:[#allocation7 + $0x98] sm:$0xff]
        %v341 = vld [vmem:[#allocation7 + $0xa0] sm:$0xff]
        %v342 = vld [vmem:[#allocation7 + $0xa8] sm:$0xff]
        %v343 = vld [vmem:[#allocation7 + $0xb0] sm:$0xff]
        %v344 = vld [vmem:[#allocation7 + $0xb8] sm:$0xff]
        %v345 = vld [vmem:[#allocation7 + $0xc0] sm:$0xff]
        %v346 = vld [vmem:[#allocation7 + $0xc8] sm:$0xff]
        %v347 = vld [vmem:[#allocation7 + $0xd0] sm:$0xff]
        %v348 = vld [vmem:[#allocation7 + $0xd8] sm:$0xff]
        %v349 = vld [vmem:[#allocation7 + $0xe0] sm:$0xff]
        %v350 = vld [vmem:[#allocation7 + $0xe8] sm:$0xff]
        %v351 = vld [vmem:[#allocation7 + $0xf0] sm:$0xff]
        %v352 = vld [vmem:[#allocation7 + $0xf8] sm:$0xff]
        %v353 = vld [vmem:[#allocation7 + $0x100] sm:$0xff]
        %v354 = vld [vmem:[#allocation7 + $0x108] sm:$0xff]
        %v355 = vld [vmem:[#allocation7 + $0x110] sm:$0xff]
        %v356 = vld [vmem:[#allocation7 + $0x118] sm:$0xff]
        %v357 = vld [vmem:[#allocation7 + $0x120] sm:$0xff]
        %v358 = vld [vmem:[#allocation7 + $0x128] sm:$0xff]
        %v359 = vld [vmem:[#allocation7 + $0x130] sm:$0xff]
        %v360 = vld [vmem:[#allocation7 + $0x138] sm:$0xff]
        %v361 = vld [vmem:[#allocation7 + $0x140] sm:$0xff]
        %v362 = vld [vmem:[#allocation7 + $0x148] sm:$0xff]
        %v363 = vld [vmem:[#allocation7 + $0x150] sm:$0xff]
        %v364 = vld [vmem:[#allocation7 + $0x158] sm:$0xff]
        %v365 = vld [vmem:[#allocation7 + $0x160] sm:$0xff]
        %v366 = vld [vmem:[#allocation7 + $0x168] sm:$0xff]
        %v367 = vld [vmem:[#allocation7 + $0x170] sm:$0xff]
        %v368 = vld [vmem:[#allocation7 + $0x178] sm:$0xff]
        %v369 = vld [vmem:[#allocation7 + $0x180] sm:$0xff]
        %v370 = vld [vmem:[#allocation7 + $0x188] sm:$0xff]
        %v371 = vld [vmem:[#allocation7 + $0x190] sm:$0xff]
        %v372 = vld [vmem:[#allocation7 + $0x198] sm:$0xff]
        %v373 = vld [vmem:[#allocation7 + $0x1a0] sm:$0xff]
        %v374 = vld [vmem:[#allocation7 + $0x1a8] sm:$0xff]
        %v375 = vld [vmem:[#allocation7 + $0x1b0] sm:$0xff]
        %v376 = vld [vmem:[#allocation7 + $0x1b8] sm:$0xff]
        %v377 = vld [vmem:[#allocation7 + $0x1c0] sm:$0xff]
        %v378 = vld [vmem:[#allocation7 + $0x1c8] sm:$0xff]
        %v379 = vld [vmem:[#allocation7 + $0x1d0] sm:$0xff]
        %v380 = vld [vmem:[#allocation7 + $0x1d8] sm:$0xff]
        %v381 = vld [vmem:[#allocation7 + $0x1e0] sm:$0xff]
        %v382 = vld [vmem:[#allocation7 + $0x1e8] sm:$0xff]
        %v383 = vld [vmem:[#allocation7 + $0x1f0] sm:$0xff]
        %v384 = vld [vmem:[#allocation7 + $0x1f8] sm:$0xff]
        %v385 = vld [vmem:[#allocation7 + $0x200] sm:$0xff]
        %v386 = vld [vmem:[#allocation7 + $0x208] sm:$0xff]
        %v387 = vld [vmem:[#allocation7 + $0x210] sm:$0xff]
        %v388 = vld [vmem:[#allocation7 + $0x218] sm:$0xff]
        %v389 = vld [vmem:[#allocation7 + $0x220] sm:$0xff]
        %v390 = vld [vmem:[#allocation7 + $0x228] sm:$0xff]
        %v391 = vld [vmem:[#allocation7 + $0x230] sm:$0xff]
        %v392 = vld [vmem:[#allocation7 + $0x238] sm:$0xff]
        %v393 = vld [vmem:[#allocation7 + $0x240] sm:$0xff]
        %v394 = vld [vmem:[#allocation7 + $0x248] sm:$0xff]
        %v395 = vld [vmem:[#allocation7 + $0x250] sm:$0xff]
        %v396 = vld [vmem:[#allocation7 + $0x258] sm:$0xff]
        %v397 = vld [vmem:[#allocation7 + $0x260] sm:$0xff]
        %v398 = vld [vmem:[#allocation7 + $0x268] sm:$0xff]
        %v399 = vld [vmem:[#allocation7 + $0x270] sm:$0xff]
        %v400 = vld [vmem:[#allocation7 + $0x278] sm:$0xff]
        %v401 = vld [vmem:[#allocation7 + $0x280] sm:$0xff]
        %v402 = vld [vmem:[#allocation7 + $0x288] sm:$0xff]
        %v403 = vld [vmem:[#allocation7 + $0x290] sm:$0xff]
        %v404 = vld [vmem:[#allocation7 + $0x298] sm:$0xff]
        %v405 = vld [vmem:[#allocation7 + $0x2a0] sm:$0xff]
        %v406 = vld [vmem:[#allocation7 + $0x2a8] sm:$0xff]
        %v407 = vld [vmem:[#allocation7 + $0x2b0] sm:$0xff]
        %v408 = vld [vmem:[#allocation7 + $0x2b8] sm:$0xff]
        %v409 = vld [vmem:[#allocation7 + $0x2c0] sm:$0xff]
        %v410 = vld [vmem:[#allocation7 + $0x2c8] sm:$0xff]
        %v411 = vld [vmem:[#allocation7 + $0x2d0] sm:$0xff]
        %v412 = vld [vmem:[#allocation7 + $0x2d8] sm:$0xff]
        %v413 = vld [vmem:[#allocation7 + $0x2e0] sm:$0xff]
        %v414 = vld [vmem:[#allocation7 + $0x2e8] sm:$0xff]
        %v415 = vld [vmem:[#allocation7 + $0x2f0] sm:$0xff]
        %v416 = vld [vmem:[#allocation7 + $0x2f8] sm:$0xff]
        %v417 = vld [vmem:[#allocation7 + $0x300] sm:$0xff]
        %v418 = vld [vmem:[#allocation7 + $0x308] sm:$0xff]
        %v419 = vld [vmem:[#allocation7 + $0x310] sm:$0xff]
        %v420 = vld [vmem:[#allocation7 + $0x318] sm:$0xff]
        %v421 = vld [vmem:[#allocation7 + $0x320] sm:$0xff]
        %v422 = vld [vmem:[#allocation7 + $0x328] sm:$0xff]
        %v423 = vld [vmem:[#allocation7 + $0x330] sm:$0xff]
        %v424 = vld [vmem:[#allocation7 + $0x338] sm:$0xff]
        %v425 = vld [vmem:[#allocation7 + $0x340] sm:$0xff]
        %v426 = vld [vmem:[#allocation7 + $0x348] sm:$0xff]
        %v427 = vld [vmem:[#allocation7 + $0x350] sm:$0xff]
        %v428 = vld [vmem:[#allocation7 + $0x358] sm:$0xff]
        %v429 = vld [vmem:[#allocation7 + $0x360] sm:$0xff]
        %v430 = vld [vmem:[#allocation7 + $0x368] sm:$0xff]
        %v431 = vld [vmem:[#allocation7 + $0x370] sm:$0xff]
        %v432 = vld [vmem:[#allocation7 + $0x378] sm:$0xff]
        %v433 = vld [vmem:[#allocation7 + $0x380] sm:$0xff]
        %v434 = vld [vmem:[#allocation7 + $0x388] sm:$0xff]
        %v435 = vld [vmem:[#allocation7 + $0x390] sm:$0xff]
        %v436 = vld [vmem:[#allocation7 + $0x398] sm:$0xff]
        %v437 = vld [vmem:[#allocation7 + $0x3a0] sm:$0xff]
        %v438 = vld [vmem:[#allocation7 + $0x3a8] sm:$0xff]
        %v439 = vld [vmem:[#allocation7 + $0x3b0] sm:$0xff]
        %v440 = vld [vmem:[#allocation7 + $0x3b8] sm:$0xff]
        %v441 = vld [vmem:[#allocation7 + $0x3c0] sm:$0xff]
        %v442 = vld [vmem:[#allocation7 + $0x3c8] sm:$0xff]
        %v443 = vld [vmem:[#allocation7 + $0x3d0] sm:$0xff]
        %v444 = vld [vmem:[#allocation7 + $0x3d8] sm:$0xff]
        %v445 = vld [vmem:[#allocation7 + $0x3e0] sm:$0xff]
        %v446 = vld [vmem:[#allocation7 + $0x3e8] sm:$0xff]
        %v447 = vld [vmem:[#allocation7 + $0x3f0] sm:$0xff]
        %v448 = vld [vmem:[#allocation7 + $0x3f8] sm:$0xff]
        %v449 = vld [vmem:[#allocation7 + $0x400] sm:$0xff]
        %v450 = vld [vmem:[#allocation7 + $0x408] sm:$0xff]
        %v451 = vld [vmem:[#allocation7 + $0x410] sm:$0xff]
        %v452 = vld [vmem:[#allocation7 + $0x418] sm:$0xff]
        %v453 = vld [vmem:[#allocation7 + $0x420] sm:$0xff]
        %v454 = vld [vmem:[#allocation7 + $0x428] sm:$0xff]
        %v455 = vld [vmem:[#allocation7 + $0x430] sm:$0xff]
        %v456 = vld [vmem:[#allocation7 + $0x438] sm:$0xff]
        %v457 = vld [vmem:[#allocation7 + $0x440] sm:$0xff]
        %v458 = vld [vmem:[#allocation7 + $0x448] sm:$0xff]
        %v459 = vld [vmem:[#allocation7 + $0x450] sm:$0xff]
        %v460 = vld [vmem:[#allocation7 + $0x458] sm:$0xff]
        %v461 = vld [vmem:[#allocation7 + $0x460] sm:$0xff]
        %v462 = vld [vmem:[#allocation7 + $0x468] sm:$0xff]
        %v463 = vld [vmem:[#allocation7 + $0x470] sm:$0xff]
        %v464 = vld [vmem:[#allocation7 + $0x478] sm:$0xff]
        %v465 = vld [vmem:[#allocation7 + $0x480] sm:$0xff]
        %v466 = vld [vmem:[#allocation7 + $0x488] sm:$0xff]
        %v467 = vld [vmem:[#allocation7 + $0x490] sm:$0xff]
        %v468 = vld [vmem:[#allocation7 + $0x498] sm:$0xff]
        %v469 = vld [vmem:[#allocation7 + $0x4a0] sm:$0xff]
        %v470 = vld [vmem:[#allocation7 + $0x4a8] sm:$0xff]
        %v471 = vld [vmem:[#allocation7 + $0x4b0] sm:$0xff]
        %v472 = vld [vmem:[#allocation7 + $0x4b8] sm:$0xff]
        %v473 = vld [vmem:[#allocation7 + $0x4c0] sm:$0xff]
        %v474 = vld [vmem:[#allocation7 + $0x4c8] sm:$0xff]
        %v475 = vld [vmem:[#allocation7 + $0x4d0] sm:$0xff]
        %v476 = vld [vmem:[#allocation7 + $0x4d8] sm:$0xff]
        %v477 = vld [vmem:[#allocation7 + $0x4e0] sm:$0xff]
        %v478 = vld [vmem:[#allocation7 + $0x4e8] sm:$0xff]
        %v479 = vld [vmem:[#allocation7 + $0x4f0] sm:$0xff]
        %v480 = vld [vmem:[#allocation7 + $0x4f8] sm:$0xff]
        %v481 = vld [vmem:[#allocation7 + $0x500] sm:$0xff]
        %v482 = vld [vmem:[#allocation7 + $0x508] sm:$0xff]
        %v483 = vld [vmem:[#allocation7 + $0x510] sm:$0xff]
        %v484 = vld [vmem:[#allocation7 + $0x518] sm:$0xff]
        %v485 = vld [vmem:[#allocation7 + $0x520] sm:$0xff]
        %v486 = vld [vmem:[#allocation7 + $0x528] sm:$0xff]
        %v487 = vld [vmem:[#allocation7 + $0x530] sm:$0xff]
        %v488 = vld [vmem:[#allocation7 + $0x538] sm:$0xff]
        %v489 = vld [vmem:[#allocation7 + $0x540] sm:$0xff]
        %v490 = vld [vmem:[#allocation7 + $0x548] sm:$0xff]
        %v491 = vld [vmem:[#allocation7 + $0x550] sm:$0xff]
        %v492 = vld [vmem:[#allocation7 + $0x558] sm:$0xff]
        %v493 = vld [vmem:[#allocation7 + $0x560] sm:$0xff]
        %v494 = vld [vmem:[#allocation7 + $0x568] sm:$0xff]
        %v495 = vld [vmem:[#allocation7 + $0x570] sm:$0xff]
        %v496 = vld [vmem:[#allocation7 + $0x578] sm:$0xff]
        %v497 = vld [vmem:[#allocation7 + $0x580] sm:$0xff]
        %v498 = vld [vmem:[#allocation7 + $0x588] sm:$0xff]
        %v499 = vld [vmem:[#allocation7 + $0x590] sm:$0xff]
        %v500 = vld [vmem:[#allocation7 + $0x598] sm:$0xff]
        %v501 = vld [vmem:[#allocation7 + $0x5a0] sm:$0xff]
        %v502 = vld [vmem:[#allocation7 + $0x5a8] sm:$0xff]
        %v503 = vld [vmem:[#allocation7 + $0x5b0] sm:$0xff]
        %v504 = vld [vmem:[#allocation7 + $0x5b8] sm:$0xff]
        %v505 = vld [vmem:[#allocation7 + $0x5c0] sm:$0xff]
        %v506 = vld [vmem:[#allocation7 + $0x5c8] sm:$0xff]
        %v507 = vld [vmem:[#allocation7 + $0x5d0] sm:$0xff]
        %v508 = vld [vmem:[#allocation7 + $0x5d8] sm:$0xff]
        %v509 = vld [vmem:[#allocation7 + $0x5e0] sm:$0xff]
        %v510 = vld [vmem:[#allocation7 + $0x5e8] sm:$0xff]
        %v511 = vld [vmem:[#allocation7 + $0x5f0] sm:$0xff]
        %v512 = vld [vmem:[#allocation7 + $0x5f8] sm:$0xff]
        %v513 = vld [vmem:[#allocation7 + $0x600] sm:$0xff]
        %v514 = vld [vmem:[#allocation7 + $0x608] sm:$0xff]
        %v515 = vld [vmem:[#allocation7 + $0x610] sm:$0xff]
        %v516 = vld [vmem:[#allocation7 + $0x618] sm:$0xff]
        %v517 = vld [vmem:[#allocation7 + $0x620] sm:$0xff]
        %v518 = vld [vmem:[#allocation7 + $0x628] sm:$0xff]
        %v519 = vld [vmem:[#allocation7 + $0x630] sm:$0xff]
        %v520 = vld [vmem:[#allocation7 + $0x638] sm:$0xff]
        %v521 = vld [vmem:[#allocation8] sm:$0xff]
        %v522 = vld [vmem:[#allocation8 + $0x8] sm:$0x3]
        %v525 = vlaneseq
        %v526 = vshrl.u32 %v525, 7
        %v527 = vsub.s32 0, %v526
        %v528 = vrot.slane %v521, %v527
        %v529 = vlaneseq
        %v530 = vshrl.u32 %v529, 7
        %v531 = vsub.s32 1, %v530
        %v532 = vrot.slane %v521, %v531
        %v533 = vlaneseq
        %v534 = vshrl.u32 %v533, 7
        %v535 = vsub.s32 2, %v534
        %v536 = vrot.slane %v521, %v535
        %v537 = vlaneseq
        %v538 = vshrl.u32 %v537, 7
        %v539 = vsub.s32 3, %v538
        %v540 = vrot.slane %v521, %v539
        %v541 = vlaneseq
        %v542 = vshrl.u32 %v541, 7
        %v543 = vsub.s32 4, %v542
        %v544 = vrot.slane %v521, %v543
        %v545 = vlaneseq
        %v546 = vshrl.u32 %v545, 7
        %v547 = vsub.s32 5, %v546
        %v548 = vrot.slane %v521, %v547
        %v549 = vlaneseq
        %v550 = vshrl.u32 %v549, 7
        %v551 = vsub.s32 6, %v550
        %v552 = vrot.slane %v521, %v551
        %v553 = vlaneseq
        %v554 = vshrl.u32 %v553, 7
        %v555 = vsub.s32 7, %v554
        %v556 = vrot.slane %v521, %v555
        %v557 = vlaneseq
        %v558 = vshrl.u32 %v557, 7
        %v559 = vsub.s32 0, %v558
        %v560 = vrot.slane %v522, %v559
        %v561 = vlaneseq
        %v562 = vshrl.u32 %v561, 7
        %v563 = vsub.s32 1, %v562
        %v564 = vrot.slane %v522, %v563
        %v577 = vunpack.c.l.b16 %v319
        %v578 = vunpack.c.h.b16 %v319
        %v579 = vunpack.c.l.b16 %v320
        %v580 = vpack.c.b16 %v577, %v577
        %v581 = vpack.c.b16 %v578, %v578
        %v582 = vpack.c.b16 %v579, %v579
        %v785 = vunpack.c.l.b16 %v321
        %v786 = vunpack.c.h.b16 %v321
        %v787 = vunpack.c.l.b16 %v322
        %v788 = vunpack.c.h.b16 %v322
        %v789 = vunpack.c.l.b16 %v323
        %v790 = vunpack.c.h.b16 %v323
        %v791 = vunpack.c.l.b16 %v324
        %v792 = vunpack.c.h.b16 %v324
        %v793 = vunpack.c.l.b16 %v325
        %v794 = vunpack.c.h.b16 %v325
        %v795 = vunpack.c.l.b16 %v326
        %v796 = vunpack.c.h.b16 %v326
        %v797 = vunpack.c.l.b16 %v327
        %v798 = vunpack.c.h.b16 %v327
        %v799 = vunpack.c.l.b16 %v328
        %v800 = vunpack.c.h.b16 %v328
        %v801 = vunpack.c.l.b16 %v329
        %v802 = vunpack.c.h.b16 %v329
        %v803 = vunpack.c.l.b16 %v330
        %v804 = vunpack.c.h.b16 %v330
        %v805 = vunpack.c.l.b16 %v331
        %v806 = vunpack.c.h.b16 %v331
        %v807 = vunpack.c.l.b16 %v332
        %v808 = vunpack.c.h.b16 %v332
        %v809 = vunpack.c.l.b16 %v333
        %v810 = vunpack.c.h.b16 %v333
        %v811 = vunpack.c.l.b16 %v334
        %v812 = vunpack.c.h.b16 %v334
        %v813 = vunpack.c.l.b16 %v335
        %v814 = vunpack.c.h.b16 %v335
        %v815 = vunpack.c.l.b16 %v336
        %v816 = vunpack.c.h.b16 %v336
        %v817 = vunpack.c.l.b16 %v337
        %v818 = vunpack.c.h.b16 %v337
        %v819 = vunpack.c.l.b16 %v338
        %v820 = vunpack.c.h.b16 %v338
        %v821 = vunpack.c.l.b16 %v339
        %v822 = vunpack.c.h.b16 %v339
        %v823 = vunpack.c.l.b16 %v340
        %v824 = vunpack.c.h.b16 %v340
        %v825 = vunpack.c.l.b16 %v341
        %v826 = vunpack.c.h.b16 %v341
        %v827 = vunpack.c.l.b16 %v342
        %v828 = vunpack.c.h.b16 %v342
        %v829 = vunpack.c.l.b16 %v343
        %v830 = vunpack.c.h.b16 %v343
        %v831 = vunpack.c.l.b16 %v344
        %v832 = vunpack.c.h.b16 %v344
        %v833 = vunpack.c.l.b16 %v345
        %v834 = vunpack.c.h.b16 %v345
        %v835 = vunpack.c.l.b16 %v346
        %v836 = vunpack.c.h.b16 %v346
        %v837 = vunpack.c.l.b16 %v347
        %v838 = vunpack.c.h.b16 %v347
        %v839 = vunpack.c.l.b16 %v348
        %v840 = vunpack.c.h.b16 %v348
        %v841 = vunpack.c.l.b16 %v349
        %v842 = vunpack.c.h.b16 %v349
        %v843 = vunpack.c.l.b16 %v350
        %v844 = vunpack.c.h.b16 %v350
        %v845 = vunpack.c.l.b16 %v351
        %v846 = vunpack.c.h.b16 %v351
        %v847 = vunpack.c.l.b16 %v352
        %v848 = vunpack.c.h.b16 %v352
        %v849 = vunpack.c.l.b16 %v353
        %v850 = vunpack.c.h.b16 %v353
        %v851 = vunpack.c.l.b16 %v354
        %v852 = vunpack.c.h.b16 %v354
        %v853 = vunpack.c.l.b16 %v355
        %v854 = vunpack.c.h.b16 %v355
        %v855 = vunpack.c.l.b16 %v356
        %v856 = vunpack.c.h.b16 %v356
        %v857 = vunpack.c.l.b16 %v357
        %v858 = vunpack.c.h.b16 %v357
        %v859 = vunpack.c.l.b16 %v358
        %v860 = vunpack.c.h.b16 %v358
        %v861 = vunpack.c.l.b16 %v359
        %v862 = vunpack.c.h.b16 %v359
        %v863 = vunpack.c.l.b16 %v360
        %v864 = vunpack.c.h.b16 %v360
        %v865 = vunpack.c.l.b16 %v361
        %v866 = vunpack.c.h.b16 %v361
        %v867 = vunpack.c.l.b16 %v362
        %v868 = vunpack.c.h.b16 %v362
        %v869 = vunpack.c.l.b16 %v363
        %v870 = vunpack.c.h.b16 %v363
        %v871 = vunpack.c.l.b16 %v364
        %v872 = vunpack.c.h.b16 %v364
        %v873 = vunpack.c.l.b16 %v365
        %v874 = vunpack.c.h.b16 %v365
        %v875 = vunpack.c.l.b16 %v366
        %v876 = vunpack.c.h.b16 %v366
        %v877 = vunpack.c.l.b16 %v367
        %v878 = vunpack.c.h.b16 %v367
        %v879 = vunpack.c.l.b16 %v368
        %v880 = vunpack.c.h.b16 %v368
        %v881 = vunpack.c.l.b16 %v369
        %v882 = vunpack.c.h.b16 %v369
        %v883 = vunpack.c.l.b16 %v370
        %v884 = vunpack.c.h.b16 %v370
        %v885 = vunpack.c.l.b16 %v371
        %v886 = vunpack.c.h.b16 %v371
        %v887 = vunpack.c.l.b16 %v372
        %v888 = vunpack.c.h.b16 %v372
        %v889 = vunpack.c.l.b16 %v373
        %v890 = vunpack.c.h.b16 %v373
        %v891 = vunpack.c.l.b16 %v374
        %v892 = vunpack.c.h.b16 %v374
        %v893 = vunpack.c.l.b16 %v375
        %v894 = vunpack.c.h.b16 %v375
        %v895 = vunpack.c.l.b16 %v376
        %v896 = vunpack.c.h.b16 %v376
        %v897 = vunpack.c.l.b16 %v377
        %v898 = vunpack.c.h.b16 %v377
        %v899 = vunpack.c.l.b16 %v378
        %v900 = vunpack.c.h.b16 %v378
        %v901 = vunpack.c.l.b16 %v379
        %v902 = vunpack.c.h.b16 %v379
        %v903 = vunpack.c.l.b16 %v380
        %v904 = vunpack.c.h.b16 %v380
        %v905 = vunpack.c.l.b16 %v381
        %v906 = vunpack.c.h.b16 %v381
        %v907 = vunpack.c.l.b16 %v382
        %v908 = vunpack.c.h.b16 %v382
        %v909 = vunpack.c.l.b16 %v383
        %v910 = vunpack.c.h.b16 %v383
        %v911 = vunpack.c.l.b16 %v384
        %v912 = vunpack.c.h.b16 %v384
        %v913 = vunpack.c.l.b16 %v385
        %v914 = vunpack.c.h.b16 %v385
        %v915 = vunpack.c.l.b16 %v386
        %v916 = vunpack.c.h.b16 %v386
        %v917 = vunpack.c.l.b16 %v387
        %v918 = vunpack.c.h.b16 %v387
        %v919 = vunpack.c.l.b16 %v388
        %v920 = vunpack.c.h.b16 %v388
        %v921 = vunpack.c.l.b16 %v389
        %v922 = vunpack.c.h.b16 %v389
        %v923 = vunpack.c.l.b16 %v390
        %v924 = vunpack.c.h.b16 %v390
        %v925 = vunpack.c.l.b16 %v391
        %v926 = vunpack.c.h.b16 %v391
        %v927 = vunpack.c.l.b16 %v392
        %v928 = vunpack.c.h.b16 %v392
        %v929 = vunpack.c.l.b16 %v393
        %v930 = vunpack.c.h.b16 %v393
        %v931 = vunpack.c.l.b16 %v394
        %v932 = vunpack.c.h.b16 %v394
        %v933 = vunpack.c.l.b16 %v395
        %v934 = vunpack.c.h.b16 %v395
        %v935 = vunpack.c.l.b16 %v396
        %v936 = vunpack.c.h.b16 %v396
        %v937 = vunpack.c.l.b16 %v397
        %v938 = vunpack.c.h.b16 %v397
        %v939 = vunpack.c.l.b16 %v398
        %v940 = vunpack.c.h.b16 %v398
        %v941 = vunpack.c.l.b16 %v399
        %v942 = vunpack.c.h.b16 %v399
        %v943 = vunpack.c.l.b16 %v400
        %v944 = vunpack.c.h.b16 %v400
        %v945 = vunpack.c.l.b16 %v401
        %v946 = vunpack.c.h.b16 %v401
        %v947 = vunpack.c.l.b16 %v402
        %v948 = vunpack.c.h.b16 %v402
        %v949 = vunpack.c.l.b16 %v403
        %v950 = vunpack.c.h.b16 %v403
        %v951 = vunpack.c.l.b16 %v404
        %v952 = vunpack.c.h.b16 %v404
        %v953 = vunpack.c.l.b16 %v405
        %v954 = vunpack.c.h.b16 %v405
        %v955 = vunpack.c.l.b16 %v406
        %v956 = vunpack.c.h.b16 %v406
        %v957 = vunpack.c.l.b16 %v407
        %v958 = vunpack.c.h.b16 %v407
        %v959 = vunpack.c.l.b16 %v408
        %v960 = vunpack.c.h.b16 %v408
        %v961 = vunpack.c.l.b16 %v409
        %v962 = vunpack.c.h.b16 %v409
        %v963 = vunpack.c.l.b16 %v410
        %v964 = vunpack.c.h.b16 %v410
        %v965 = vunpack.c.l.b16 %v411
        %v966 = vunpack.c.h.b16 %v411
        %v967 = vunpack.c.l.b16 %v412
        %v968 = vunpack.c.h.b16 %v412
        %v969 = vunpack.c.l.b16 %v413
        %v970 = vunpack.c.h.b16 %v413
        %v971 = vunpack.c.l.b16 %v414
        %v972 = vunpack.c.h.b16 %v414
        %v973 = vunpack.c.l.b16 %v415
        %v974 = vunpack.c.h.b16 %v415
        %v975 = vunpack.c.l.b16 %v416
        %v976 = vunpack.c.h.b16 %v416
        %v977 = vunpack.c.l.b16 %v417
        %v978 = vunpack.c.h.b16 %v417
        %v979 = vunpack.c.l.b16 %v418
        %v980 = vunpack.c.h.b16 %v418
        %v981 = vunpack.c.l.b16 %v419
        %v982 = vunpack.c.h.b16 %v419
        %v983 = vunpack.c.l.b16 %v420
        %v984 = vunpack.c.h.b16 %v420
        %v985 = vunpack.c.l.b16 %v421
        %v986 = vunpack.c.h.b16 %v421
        %v987 = vunpack.c.l.b16 %v422
        %v988 = vunpack.c.h.b16 %v422
        %v989 = vunpack.c.l.b16 %v423
        %v990 = vunpack.c.h.b16 %v423
        %v991 = vunpack.c.l.b16 %v424
        %v992 = vunpack.c.h.b16 %v424
        %v993 = vunpack.c.l.b16 %v425
        %v994 = vunpack.c.h.b16 %v425
        %v995 = vunpack.c.l.b16 %v426
        %v996 = vunpack.c.h.b16 %v426
        %v997 = vunpack.c.l.b16 %v427
        %v998 = vunpack.c.h.b16 %v427
        %v999 = vunpack.c.l.b16 %v428
        %v1000 = vunpack.c.h.b16 %v428
        %v1001 = vunpack.c.l.b16 %v429
        %v1002 = vunpack.c.h.b16 %v429
        %v1003 = vunpack.c.l.b16 %v430
        %v1004 = vunpack.c.h.b16 %v430
        %v1005 = vunpack.c.l.b16 %v431
        %v1006 = vunpack.c.h.b16 %v431
        %v1007 = vunpack.c.l.b16 %v432
        %v1008 = vunpack.c.h.b16 %v432
        %v1009 = vunpack.c.l.b16 %v433
        %v1010 = vunpack.c.h.b16 %v433
        %v1011 = vunpack.c.l.b16 %v434
        %v1012 = vunpack.c.h.b16 %v434
        %v1013 = vunpack.c.l.b16 %v435
        %v1014 = vunpack.c.h.b16 %v435
        %v1015 = vunpack.c.l.b16 %v436
        %v1016 = vunpack.c.h.b16 %v436
        %v1017 = vunpack.c.l.b16 %v437
        %v1018 = vunpack.c.h.b16 %v437
        %v1019 = vunpack.c.l.b16 %v438
        %v1020 = vunpack.c.h.b16 %v438
        %v1021 = vunpack.c.l.b16 %v439
        %v1022 = vunpack.c.h.b16 %v439
        %v1023 = vunpack.c.l.b16 %v440
        %v1024 = vunpack.c.h.b16 %v440
        %v1025 = vunpack.c.l.b16 %v441
        %v1026 = vunpack.c.h.b16 %v441
        %v1027 = vunpack.c.l.b16 %v442
        %v1028 = vunpack.c.h.b16 %v442
        %v1029 = vunpack.c.l.b16 %v443
        %v1030 = vunpack.c.h.b16 %v443
        %v1031 = vunpack.c.l.b16 %v444
        %v1032 = vunpack.c.h.b16 %v444
        %v1033 = vunpack.c.l.b16 %v445
        %v1034 = vunpack.c.h.b16 %v445
        %v1035 = vunpack.c.l.b16 %v446
        %v1036 = vunpack.c.h.b16 %v446
        %v1037 = vunpack.c.l.b16 %v447
        %v1038 = vunpack.c.h.b16 %v447
        %v1039 = vunpack.c.l.b16 %v448
        %v1040 = vunpack.c.h.b16 %v448
        %v1041 = vunpack.c.l.b16 %v449
        %v1042 = vunpack.c.h.b16 %v449
        %v1043 = vunpack.c.l.b16 %v450
        %v1044 = vunpack.c.h.b16 %v450
        %v1045 = vunpack.c.l.b16 %v451
        %v1046 = vunpack.c.h.b16 %v451
        %v1047 = vunpack.c.l.b16 %v452
        %v1048 = vunpack.c.h.b16 %v452
        %v1049 = vunpack.c.l.b16 %v453
        %v1050 = vunpack.c.h.b16 %v453
        %v1051 = vunpack.c.l.b16 %v454
        %v1052 = vunpack.c.h.b16 %v454
        %v1053 = vunpack.c.l.b16 %v455
        %v1054 = vunpack.c.h.b16 %v455
        %v1055 = vunpack.c.l.b16 %v456
        %v1056 = vunpack.c.h.b16 %v456
        %v1057 = vunpack.c.l.b16 %v457
        %v1058 = vunpack.c.h.b16 %v457
        %v1059 = vunpack.c.l.b16 %v458
        %v1060 = vunpack.c.h.b16 %v458
        %v1061 = vunpack.c.l.b16 %v459
        %v1062 = vunpack.c.h.b16 %v459
        %v1063 = vunpack.c.l.b16 %v460
        %v1064 = vunpack.c.h.b16 %v460
        %v1065 = vunpack.c.l.b16 %v461
        %v1066 = vunpack.c.h.b16 %v461
        %v1067 = vunpack.c.l.b16 %v462
        %v1068 = vunpack.c.h.b16 %v462
        %v1069 = vunpack.c.l.b16 %v463
        %v1070 = vunpack.c.h.b16 %v463
        %v1071 = vunpack.c.l.b16 %v464
        %v1072 = vunpack.c.h.b16 %v464
        %v1073 = vunpack.c.l.b16 %v465
        %v1074 = vunpack.c.h.b16 %v465
        %v1075 = vunpack.c.l.b16 %v466
        %v1076 = vunpack.c.h.b16 %v466
        %v1077 = vunpack.c.l.b16 %v467
        %v1078 = vunpack.c.h.b16 %v467
        %v1079 = vunpack.c.l.b16 %v468
        %v1080 = vunpack.c.h.b16 %v468
        %v1081 = vunpack.c.l.b16 %v469
        %v1082 = vunpack.c.h.b16 %v469
        %v1083 = vunpack.c.l.b16 %v470
        %v1084 = vunpack.c.h.b16 %v470
        %v1085 = vunpack.c.l.b16 %v471
        %v1086 = vunpack.c.h.b16 %v471
        %v1087 = vunpack.c.l.b16 %v472
        %v1088 = vunpack.c.h.b16 %v472
        %v1089 = vunpack.c.l.b16 %v473
        %v1090 = vunpack.c.h.b16 %v473
        %v1091 = vunpack.c.l.b16 %v474
        %v1092 = vunpack.c.h.b16 %v474
        %v1093 = vunpack.c.l.b16 %v475
        %v1094 = vunpack.c.h.b16 %v475
        %v1095 = vunpack.c.l.b16 %v476
        %v1096 = vunpack.c.h.b16 %v476
        %v1097 = vunpack.c.l.b16 %v477
        %v1098 = vunpack.c.h.b16 %v477
        %v1099 = vunpack.c.l.b16 %v478
        %v1100 = vunpack.c.h.b16 %v478
        %v1101 = vunpack.c.l.b16 %v479
        %v1102 = vunpack.c.h.b16 %v479
        %v1103 = vunpack.c.l.b16 %v480
        %v1104 = vunpack.c.h.b16 %v480
        %v1105 = vunpack.c.l.b16 %v481
        %v1106 = vunpack.c.h.b16 %v481
        %v1107 = vunpack.c.l.b16 %v482
        %v1108 = vunpack.c.h.b16 %v482
        %v1109 = vunpack.c.l.b16 %v483
        %v1110 = vunpack.c.h.b16 %v483
        %v1111 = vunpack.c.l.b16 %v484
        %v1112 = vunpack.c.h.b16 %v484
        %v1113 = vunpack.c.l.b16 %v485
        %v1114 = vunpack.c.h.b16 %v485
        %v1115 = vunpack.c.l.b16 %v486
        %v1116 = vunpack.c.h.b16 %v486
        %v1117 = vunpack.c.l.b16 %v487
        %v1118 = vunpack.c.h.b16 %v487
        %v1119 = vunpack.c.l.b16 %v488
        %v1120 = vunpack.c.h.b16 %v488
        %v1121 = vunpack.c.l.b16 %v489
        %v1122 = vunpack.c.h.b16 %v489
        %v1123 = vunpack.c.l.b16 %v490
        %v1124 = vunpack.c.h.b16 %v490
        %v1125 = vunpack.c.l.b16 %v491
        %v1126 = vunpack.c.h.b16 %v491
        %v1127 = vunpack.c.l.b16 %v492
        %v1128 = vunpack.c.h.b16 %v492
        %v1129 = vunpack.c.l.b16 %v493
        %v1130 = vunpack.c.h.b16 %v493
        %v1131 = vunpack.c.l.b16 %v494
        %v1132 = vunpack.c.h.b16 %v494
        %v1133 = vunpack.c.l.b16 %v495
        %v1134 = vunpack.c.h.b16 %v495
        %v1135 = vunpack.c.l.b16 %v496
        %v1136 = vunpack.c.h.b16 %v496
        %v1137 = vunpack.c.l.b16 %v497
        %v1138 = vunpack.c.h.b16 %v497
        %v1139 = vunpack.c.l.b16 %v498
        %v1140 = vunpack.c.h.b16 %v498
        %v1141 = vunpack.c.l.b16 %v499
        %v1142 = vunpack.c.h.b16 %v499
        %v1143 = vunpack.c.l.b16 %v500
        %v1144 = vunpack.c.h.b16 %v500
        %v1145 = vunpack.c.l.b16 %v501
        %v1146 = vunpack.c.h.b16 %v501
        %v1147 = vunpack.c.l.b16 %v502
        %v1148 = vunpack.c.h.b16 %v502
        %v1149 = vunpack.c.l.b16 %v503
        %v1150 = vunpack.c.h.b16 %v503
        %v1151 = vunpack.c.l.b16 %v504
        %v1152 = vunpack.c.h.b16 %v504
        %v1153 = vunpack.c.l.b16 %v505
        %v1154 = vunpack.c.h.b16 %v505
        %v1155 = vunpack.c.l.b16 %v506
        %v1156 = vunpack.c.h.b16 %v506
        %v1157 = vunpack.c.l.b16 %v507
        %v1158 = vunpack.c.h.b16 %v507
        %v1159 = vunpack.c.l.b16 %v508
        %v1160 = vunpack.c.h.b16 %v508
        %v1161 = vunpack.c.l.b16 %v509
        %v1162 = vunpack.c.h.b16 %v509
        %v1163 = vunpack.c.l.b16 %v510
        %v1164 = vunpack.c.h.b16 %v510
        %v1165 = vunpack.c.l.b16 %v511
        %v1166 = vunpack.c.h.b16 %v511
        %v1167 = vunpack.c.l.b16 %v512
        %v1168 = vunpack.c.h.b16 %v512
        %v1169 = vunpack.c.l.b16 %v513
        %v1170 = vunpack.c.h.b16 %v513
        %v1171 = vunpack.c.l.b16 %v514
        %v1172 = vunpack.c.h.b16 %v514
        %v1173 = vunpack.c.l.b16 %v515
        %v1174 = vunpack.c.h.b16 %v515
        %v1175 = vunpack.c.l.b16 %v516
        %v1176 = vunpack.c.h.b16 %v516
        %v1177 = vunpack.c.l.b16 %v517
        %v1178 = vunpack.c.h.b16 %v517
        %v1179 = vunpack.c.l.b16 %v518
        %v1180 = vunpack.c.h.b16 %v518
        %v1181 = vunpack.c.l.b16 %v519
        %v1182 = vunpack.c.h.b16 %v519
        %v1183 = vunpack.c.l.b16 %v520
        %v1184 = vunpack.c.h.b16 %v520
        %v1185 = vpack.c.b16 %v795, %v785
        %v1186 = vpack.c.b16 %v796, %v786
        %v1187 = vpack.c.b16 %v797, %v787
        %v1188 = vpack.c.b16 %v798, %v788
        %v1189 = vpack.c.b16 %v799, %v789
        %v1190 = vpack.c.b16 %v800, %v790
        %v1191 = vpack.c.b16 %v801, %v791
        %v1192 = vpack.c.b16 %v802, %v792
        %v1193 = vpack.c.b16 %v803, %v793
        %v1194 = vpack.c.b16 %v804, %v794
        %v1195 = vpack.c.b16 %v815, %v805
        %v1196 = vpack.c.b16 %v816, %v806
        %v1197 = vpack.c.b16 %v817, %v807
        %v1198 = vpack.c.b16 %v818, %v808
        %v1199 = vpack.c.b16 %v819, %v809
        %v1200 = vpack.c.b16 %v820, %v810
        %v1201 = vpack.c.b16 %v821, %v811
        %v1202 = vpack.c.b16 %v822, %v812
        %v1203 = vpack.c.b16 %v823, %v813
        %v1204 = vpack.c.b16 %v824, %v814
        %v1205 = vpack.c.b16 %v835, %v825
        %v1206 = vpack.c.b16 %v836, %v826
        %v1207 = vpack.c.b16 %v837, %v827
        %v1208 = vpack.c.b16 %v838, %v828
        %v1209 = vpack.c.b16 %v839, %v829
        %v1210 = vpack.c.b16 %v840, %v830
        %v1211 = vpack.c.b16 %v841, %v831
        %v1212 = vpack.c.b16 %v842, %v832
        %v1213 = vpack.c.b16 %v843, %v833
        %v1214 = vpack.c.b16 %v844, %v834
        %v1215 = vpack.c.b16 %v855, %v845
        %v1216 = vpack.c.b16 %v856, %v846
        %v1217 = vpack.c.b16 %v857, %v847
        %v1218 = vpack.c.b16 %v858, %v848
        %v1219 = vpack.c.b16 %v859, %v849
        %v1220 = vpack.c.b16 %v860, %v850
        %v1221 = vpack.c.b16 %v861, %v851
        %v1222 = vpack.c.b16 %v862, %v852
        %v1223 = vpack.c.b16 %v863, %v853
        %v1224 = vpack.c.b16 %v864, %v854
        %v1225 = vpack.c.b16 %v875, %v865
        %v1226 = vpack.c.b16 %v876, %v866
        %v1227 = vpack.c.b16 %v877, %v867
        %v1228 = vpack.c.b16 %v878, %v868
        %v1229 = vpack.c.b16 %v879, %v869
        %v1230 = vpack.c.b16 %v880, %v870
        %v1231 = vpack.c.b16 %v881, %v871
        %v1232 = vpack.c.b16 %v882, %v872
        %v1233 = vpack.c.b16 %v883, %v873
        %v1234 = vpack.c.b16 %v884, %v874
        %v1235 = vpack.c.b16 %v895, %v885
        %v1236 = vpack.c.b16 %v896, %v886
        %v1237 = vpack.c.b16 %v897, %v887
        %v1238 = vpack.c.b16 %v898, %v888
        %v1239 = vpack.c.b16 %v899, %v889
        %v1240 = vpack.c.b16 %v900, %v890
        %v1241 = vpack.c.b16 %v901, %v891
        %v1242 = vpack.c.b16 %v902, %v892
        %v1243 = vpack.c.b16 %v903, %v893
        %v1244 = vpack.c.b16 %v904, %v894
        %v1245 = vpack.c.b16 %v915, %v905
        %v1246 = vpack.c.b16 %v916, %v906
        %v1247 = vpack.c.b16 %v917, %v907
        %v1248 = vpack.c.b16 %v918, %v908
        %v1249 = vpack.c.b16 %v919, %v909
        %v1250 = vpack.c.b16 %v920, %v910
        %v1251 = vpack.c.b16 %v921, %v911
        %v1252 = vpack.c.b16 %v922, %v912
        %v1253 = vpack.c.b16 %v923, %v913
        %v1254 = vpack.c.b16 %v924, %v914
        %v1255 = vpack.c.b16 %v935, %v925
        %v1256 = vpack.c.b16 %v936, %v926
        %v1257 = vpack.c.b16 %v937, %v927
        %v1258 = vpack.c.b16 %v938, %v928
        %v1259 = vpack.c.b16 %v939, %v929
        %v1260 = vpack.c.b16 %v940, %v930
        %v1261 = vpack.c.b16 %v941, %v931
        %v1262 = vpack.c.b16 %v942, %v932
        %v1263 = vpack.c.b16 %v943, %v933
        %v1264 = vpack.c.b16 %v944, %v934
        %v1265 = vpack.c.b16 %v955, %v945
        %v1266 = vpack.c.b16 %v956, %v946
        %v1267 = vpack.c.b16 %v957, %v947
        %v1268 = vpack.c.b16 %v958, %v948
        %v1269 = vpack.c.b16 %v959, %v949
        %v1270 = vpack.c.b16 %v960, %v950
        %v1271 = vpack.c.b16 %v961, %v951
        %v1272 = vpack.c.b16 %v962, %v952
        %v1273 = vpack.c.b16 %v963, %v953
        %v1274 = vpack.c.b16 %v964, %v954
        %v1275 = vpack.c.b16 %v975, %v965
        %v1276 = vpack.c.b16 %v976, %v966
        %v1277 = vpack.c.b16 %v977, %v967
        %v1278 = vpack.c.b16 %v978, %v968
        %v1279 = vpack.c.b16 %v979, %v969
        %v1280 = vpack.c.b16 %v980, %v970
        %v1281 = vpack.c.b16 %v981, %v971
        %v1282 = vpack.c.b16 %v982, %v972
        %v1283 = vpack.c.b16 %v983, %v973
        %v1284 = vpack.c.b16 %v984, %v974
        %v1285 = vpack.c.b16 %v995, %v985
        %v1286 = vpack.c.b16 %v996, %v986
        %v1287 = vpack.c.b16 %v997, %v987
        %v1288 = vpack.c.b16 %v998, %v988
        %v1289 = vpack.c.b16 %v999, %v989
        %v1290 = vpack.c.b16 %v1000, %v990
        %v1291 = vpack.c.b16 %v1001, %v991
        %v1292 = vpack.c.b16 %v1002, %v992
        %v1293 = vpack.c.b16 %v1003, %v993
        %v1294 = vpack.c.b16 %v1004, %v994
        %v1295 = vpack.c.b16 %v1015, %v1005
        %v1296 = vpack.c.b16 %v1016, %v1006
        %v1297 = vpack.c.b16 %v1017, %v1007
        %v1298 = vpack.c.b16 %v1018, %v1008
        %v1299 = vpack.c.b16 %v1019, %v1009
        %v1300 = vpack.c.b16 %v1020, %v1010
        %v1301 = vpack.c.b16 %v1021, %v1011
        %v1302 = vpack.c.b16 %v1022, %v1012
        %v1303 = vpack.c.b16 %v1023, %v1013
        %v1304 = vpack.c.b16 %v1024, %v1014
        %v1305 = vpack.c.b16 %v1035, %v1025
        %v1306 = vpack.c.b16 %v1036, %v1026
        %v1307 = vpack.c.b16 %v1037, %v1027
        %v1308 = vpack.c.b16 %v1038, %v1028
        %v1309 = vpack.c.b16 %v1039, %v1029
        %v1310 = vpack.c.b16 %v1040, %v1030
        %v1311 = vpack.c.b16 %v1041, %v1031
        %v1312 = vpack.c.b16 %v1042, %v1032
        %v1313 = vpack.c.b16 %v1043, %v1033
        %v1314 = vpack.c.b16 %v1044, %v1034
        %v1315 = vpack.c.b16 %v1055, %v1045
        %v1316 = vpack.c.b16 %v1056, %v1046
        %v1317 = vpack.c.b16 %v1057, %v1047
        %v1318 = vpack.c.b16 %v1058, %v1048
        %v1319 = vpack.c.b16 %v1059, %v1049
        %v1320 = vpack.c.b16 %v1060, %v1050
        %v1321 = vpack.c.b16 %v1061, %v1051
        %v1322 = vpack.c.b16 %v1062, %v1052
        %v1323 = vpack.c.b16 %v1063, %v1053
        %v1324 = vpack.c.b16 %v1064, %v1054
        %v1325 = vpack.c.b16 %v1075, %v1065
        %v1326 = vpack.c.b16 %v1076, %v1066
        %v1327 = vpack.c.b16 %v1077, %v1067
        %v1328 = vpack.c.b16 %v1078, %v1068
        %v1329 = vpack.c.b16 %v1079, %v1069
        %v1330 = vpack.c.b16 %v1080, %v1070
        %v1331 = vpack.c.b16 %v1081, %v1071
        %v1332 = vpack.c.b16 %v1082, %v1072
        %v1333 = vpack.c.b16 %v1083, %v1073
        %v1334 = vpack.c.b16 %v1084, %v1074
        %v1335 = vpack.c.b16 %v1095, %v1085
        %v1336 = vpack.c.b16 %v1096, %v1086
        %v1337 = vpack.c.b16 %v1097, %v1087
        %v1338 = vpack.c.b16 %v1098, %v1088
        %v1339 = vpack.c.b16 %v1099, %v1089
        %v1340 = vpack.c.b16 %v1100, %v1090
        %v1341 = vpack.c.b16 %v1101, %v1091
        %v1342 = vpack.c.b16 %v1102, %v1092
        %v1343 = vpack.c.b16 %v1103, %v1093
        %v1344 = vpack.c.b16 %v1104, %v1094
        %v1345 = vpack.c.b16 %v1115, %v1105
        %v1346 = vpack.c.b16 %v1116, %v1106
        %v1347 = vpack.c.b16 %v1117, %v1107
        %v1348 = vpack.c.b16 %v1118, %v1108
        %v1349 = vpack.c.b16 %v1119, %v1109
        %v1350 = vpack.c.b16 %v1120, %v1110
        %v1351 = vpack.c.b16 %v1121, %v1111
        %v1352 = vpack.c.b16 %v1122, %v1112
        %v1353 = vpack.c.b16 %v1123, %v1113
        %v1354 = vpack.c.b16 %v1124, %v1114
        %v1355 = vpack.c.b16 %v1135, %v1125
        %v1356 = vpack.c.b16 %v1136, %v1126
        %v1357 = vpack.c.b16 %v1137, %v1127
        %v1358 = vpack.c.b16 %v1138, %v1128
        %v1359 = vpack.c.b16 %v1139, %v1129
        %v1360 = vpack.c.b16 %v1140, %v1130
        %v1361 = vpack.c.b16 %v1141, %v1131
        %v1362 = vpack.c.b16 %v1142, %v1132
        %v1363 = vpack.c.b16 %v1143, %v1133
        %v1364 = vpack.c.b16 %v1144, %v1134
        %v1365 = vpack.c.b16 %v1155, %v1145
        %v1366 = vpack.c.b16 %v1156, %v1146
        %v1367 = vpack.c.b16 %v1157, %v1147
        %v1368 = vpack.c.b16 %v1158, %v1148
        %v1369 = vpack.c.b16 %v1159, %v1149
        %v1370 = vpack.c.b16 %v1160, %v1150
        %v1371 = vpack.c.b16 %v1161, %v1151
        %v1372 = vpack.c.b16 %v1162, %v1152
        %v1373 = vpack.c.b16 %v1163, %v1153
        %v1374 = vpack.c.b16 %v1164, %v1154
        %v1375 = vpack.c.b16 %v1175, %v1165
        %v1376 = vpack.c.b16 %v1176, %v1166
        %v1377 = vpack.c.b16 %v1177, %v1167
        %v1378 = vpack.c.b16 %v1178, %v1168
        %v1379 = vpack.c.b16 %v1179, %v1169
        %v1380 = vpack.c.b16 %v1180, %v1170
        %v1381 = vpack.c.b16 %v1181, %v1171
        %v1382 = vpack.c.b16 %v1182, %v1172
        %v1383 = vpack.c.b16 %v1183, %v1173
        %v1384 = vpack.c.b16 %v1184, %v1174
        %vm1585 = vcmask 523264
        %v1587 = vsel %vm1585, %v582, 0
        %1589 = vmatprep.subr.bf16.mxu0 %v1256
        %1590 = vmatpush1.bf16.msra.mxu0 %v1255
        %1591 = vmatprep.subr.bf16.mxu0 %v1246
        %1592 = vmatpush1.bf16.msra.mxu0 %v1245
        %1593 = vmatprep.subr.bf16.mxu0 %v1236
        %1594 = vmatpush1.bf16.msra.mxu0 %v1235
        %1595 = vmatprep.subr.bf16.mxu0 %v1226
        %1596 = vmatpush1.bf16.msra.mxu0 %v1225
        %1597 = vmatprep.subr.bf16.mxu0 %v1216
        %1598 = vmatpush1.bf16.msra.mxu0 %v1215
        %1599 = vmatprep.subr.bf16.mxu0 %v1206
        %1600 = vmatpush1.bf16.msra.mxu0 %v1205
        %1601 = vmatprep.subr.bf16.mxu0 %v1196
        %1602 = vmatpush1.bf16.msra.mxu0 %v1195
        %1603 = vmatprep.subr.bf16.mxu0 %v1186
        %1604 = vmatpush1.bf16.msra.mxu0 %v1185
        %1605 = vmatprep.subr.bf16.mxu0 %v1336
        %1606 = vmatpush2.bf16.msra.mxu0 %v1335
        %1607 = vmatprep.subr.bf16.mxu0 %v1326
        %1608 = vmatpush2.bf16.msra.mxu0 %v1325
        %1609 = vmatprep.subr.bf16.mxu0 %v1316
        %1610 = vmatpush2.bf16.msra.mxu0 %v1315
        %1611 = vmatprep.subr.bf16.mxu0 %v1306
        %1612 = vmatpush2.bf16.msra.mxu0 %v1305
        %1613 = vmatprep.subr.bf16.mxu0 %v1296
        %1614 = vmatpush2.bf16.msra.mxu0 %v1295
        %1615 = vmatprep.subr.bf16.mxu0 %v1286
        %1616 = vmatpush2.bf16.msra.mxu0 %v1285
        %1617 = vmatprep.subr.bf16.mxu0 %v1276
        %1618 = vmatpush2.bf16.msra.mxu0 %v1275
        %1619 = vmatprep.subr.bf16.mxu0 %v1266
        %1620 = vmatpush2.bf16.msra.mxu0 %v1265
        %1621 = vmatprep.mubr.bf16.mxu0 %v581
        %1622 = vmatmul.mubr.bf16.gmra.mxu0 %v580
        %v1623 = vpop.f32.mrf.mxu0
        %v1624 = vadd.f32 %v528, %v1623
        %v1625 = vpop.f32.mrf.mxu0
        %v1626 = vadd.f32 %v532, %v1625
        %v1627 = vpop.f32.mrf.mxu0
        %v1628 = vpop.f32.mrf.mxu0
        %1629 = vdwg.mxu0
        %1630 = vmatprep.subr.bf16.mxu0 0
        %1631 = vmatpush1.bf16.msra.mxu0 0
        %1632 = vmatprep.subr.bf16.mxu0 0
        %1633 = vmatpush1.bf16.msra.mxu0 0
        %1634 = vmatprep.subr.bf16.mxu0 0
        %1635 = vmatpush1.bf16.msra.mxu0 0
        %1636 = vmatprep.subr.bf16.mxu0 0
        %1637 = vmatpush1.bf16.msra.mxu0 0
        %1638 = vmatprep.subr.bf16.mxu0 %v1376
        %1639 = vmatpush1.bf16.msra.mxu0 %v1375
        %1640 = vmatprep.subr.bf16.mxu0 %v1366
        %1641 = vmatpush1.bf16.msra.mxu0 %v1365
        %1642 = vmatprep.subr.bf16.mxu0 %v1356
        %1643 = vmatpush1.bf16.msra.mxu0 %v1355
        %1644 = vmatprep.subr.bf16.mxu0 %v1346
        %1645 = vmatpush1.bf16.msra.mxu0 %v1345
        %1646 = vmatprep.subr.bf16.mxu0 0
        %1647 = vmatpush2.bf16.msra.mxu0 0
        %1648 = vmatprep.subr.bf16.mxu0 0
        %1649 = vmatpush2.bf16.msra.mxu0 0
        %1650 = vmatprep.subr.bf16.mxu0 0
        %1651 = vmatpush2.bf16.msra.mxu0 0
        %1652 = vmatprep.subr.bf16.mxu0 0
        %1653 = vmatpush2.bf16.msra.mxu0 0
        %1654 = vmatprep.subr.bf16.mxu0 0
        %1655 = vmatpush2.bf16.msra.mxu0 0
        %1656 = vmatprep.subr.bf16.mxu0 0
        %1657 = vmatpush2.bf16.msra.mxu0 0
        %1658 = vmatprep.subr.bf16.mxu0 0
        %1659 = vmatpush2.bf16.msra.mxu0 0
        %1660 = vmatprep.subr.bf16.mxu0 0
        %1661 = vmatpush2.bf16.msra.mxu0 0
        %1662 = vmatprep.mubr.bf16.mxu0 0
        %1663 = vmatmul.mubr.bf16.gmra.mxu0 %v1587
        %v1664 = vpop.f32.mrf.mxu0
        %v1665 = vadd.f32 %v1624, %v1664
        %v1666 = vpop.f32.mrf.mxu0
        %v1667 = vadd.f32 %v1626, %v1666
        %v1668 = vpop.f32.mrf.mxu0
        %v1669 = vpop.f32.mrf.mxu0
        %1670 = vdwg.mxu0
        %1671 = vmatprep.subr.bf16.mxu0 %v1258
        %1672 = vmatpush1.bf16.msra.mxu0 %v1257
        %1673 = vmatprep.subr.bf16.mxu0 %v1248
        %1674 = vmatpush1.bf16.msra.mxu0 %v1247
        %1675 = vmatprep.subr.bf16.mxu0 %v1238
        %1676 = vmatpush1.bf16.msra.mxu0 %v1237
        %1677 = vmatprep.subr.bf16.mxu0 %v1228
        %1678 = vmatpush1.bf16.msra.mxu0 %v1227
        %1679 = vmatprep.subr.bf16.mxu0 %v1218
        %1680 = vmatpush1.bf16.msra.mxu0 %v1217
        %1681 = vmatprep.subr.bf16.mxu0 %v1208
        %1682 = vmatpush1.bf16.msra.mxu0 %v1207
        %1683 = vmatprep.subr.bf16.mxu0 %v1198
        %1684 = vmatpush1.bf16.msra.mxu0 %v1197
        %1685 = vmatprep.subr.bf16.mxu0 %v1188
        %1686 = vmatpush1.bf16.msra.mxu0 %v1187
        %1687 = vmatprep.subr.bf16.mxu0 %v1338
        %1688 = vmatpush2.bf16.msra.mxu0 %v1337
        %1689 = vmatprep.subr.bf16.mxu0 %v1328
        %1690 = vmatpush2.bf16.msra.mxu0 %v1327
        %1691 = vmatprep.subr.bf16.mxu0 %v1318
        %1692 = vmatpush2.bf16.msra.mxu0 %v1317
        %1693 = vmatprep.subr.bf16.mxu0 %v1308
        %1694 = vmatpush2.bf16.msra.mxu0 %v1307
        %1695 = vmatprep.subr.bf16.mxu0 %v1298
        %1696 = vmatpush2.bf16.msra.mxu0 %v1297
        %1697 = vmatprep.subr.bf16.mxu0 %v1288
        %1698 = vmatpush2.bf16.msra.mxu0 %v1287
        %1699 = vmatprep.subr.bf16.mxu0 %v1278
        %1700 = vmatpush2.bf16.msra.mxu0 %v1277
        %1701 = vmatprep.subr.bf16.mxu0 %v1268
        %1702 = vmatpush2.bf16.msra.mxu0 %v1267
        %1703 = vmatprep.mubr.bf16.mxu0 %v581
        %1704 = vmatmul.mubr.bf16.gmra.mxu0 %v580
        %v1705 = vpop.f32.mrf.mxu0
        %v1706 = vadd.f32 %v536, %v1705
        %v1707 = vpop.f32.mrf.mxu0
        %v1708 = vadd.f32 %v540, %v1707
        %v1709 = vpop.f32.mrf.mxu0
        %v1710 = vpop.f32.mrf.mxu0
        %1711 = vdwg.mxu0
        %1712 = vmatprep.subr.bf16.mxu0 0
        %1713 = vmatpush1.bf16.msra.mxu0 0
        %1714 = vmatprep.subr.bf16.mxu0 0
        %1715 = vmatpush1.bf16.msra.mxu0 0
        %1716 = vmatprep.subr.bf16.mxu0 0
        %1717 = vmatpush1.bf16.msra.mxu0 0
        %1718 = vmatprep.subr.bf16.mxu0 0
        %1719 = vmatpush1.bf16.msra.mxu0 0
        %1720 = vmatprep.subr.bf16.mxu0 %v1378
        %1721 = vmatpush1.bf16.msra.mxu0 %v1377
        %1722 = vmatprep.subr.bf16.mxu0 %v1368
        %1723 = vmatpush1.bf16.msra.mxu0 %v1367
        %1724 = vmatprep.subr.bf16.mxu0 %v1358
        %1725 = vmatpush1.bf16.msra.mxu0 %v1357
        %1726 = vmatprep.subr.bf16.mxu0 %v1348
        %1727 = vmatpush1.bf16.msra.mxu0 %v1347
        %1728 = vmatprep.subr.bf16.mxu0 0
        %1729 = vmatpush2.bf16.msra.mxu0 0
        %1730 = vmatprep.subr.bf16.mxu0 0
        %1731 = vmatpush2.bf16.msra.mxu0 0
        %1732 = vmatprep.subr.bf16.mxu0 0
        %1733 = vmatpush2.bf16.msra.mxu0 0
        %1734 = vmatprep.subr.bf16.mxu0 0
        %1735 = vmatpush2.bf16.msra.mxu0 0
        %1736 = vmatprep.subr.bf16.mxu0 0
        %1737 = vmatpush2.bf16.msra.mxu0 0
        %1738 = vmatprep.subr.bf16.mxu0 0
        %1739 = vmatpush2.bf16.msra.mxu0 0
        %1740 = vmatprep.subr.bf16.mxu0 0
        %1741 = vmatpush2.bf16.msra.mxu0 0
        %1742 = vmatprep.subr.bf16.mxu0 0
        %1743 = vmatpush2.bf16.msra.mxu0 0
        %1744 = vmatprep.mubr.bf16.mxu0 0
        %1745 = vmatmul.mubr.bf16.gmra.mxu0 %v1587
        %v1746 = vpop.f32.mrf.mxu0
        %v1747 = vadd.f32 %v1706, %v1746
        %v1748 = vpop.f32.mrf.mxu0
        %v1749 = vadd.f32 %v1708, %v1748
        %v1750 = vpop.f32.mrf.mxu0
        %v1751 = vpop.f32.mrf.mxu0
        %1752 = vdwg.mxu0
        %1753 = vmatprep.subr.bf16.mxu0 %v1260
        %1754 = vmatpush1.bf16.msra.mxu0 %v1259
        %1755 = vmatprep.subr.bf16.mxu0 %v1250
        %1756 = vmatpush1.bf16.msra.mxu0 %v1249
        %1757 = vmatprep.subr.bf16.mxu0 %v1240
        %1758 = vmatpush1.bf16.msra.mxu0 %v1239
        %1759 = vmatprep.subr.bf16.mxu0 %v1230
        %1760 = vmatpush1.bf16.msra.mxu0 %v1229
        %1761 = vmatprep.subr.bf16.mxu0 %v1220
        %1762 = vmatpush1.bf16.msra.mxu0 %v1219
        %1763 = vmatprep.subr.bf16.mxu0 %v1210
        %1764 = vmatpush1.bf16.msra.mxu0 %v1209
        %1765 = vmatprep.subr.bf16.mxu0 %v1200
        %1766 = vmatpush1.bf16.msra.mxu0 %v1199
        %1767 = vmatprep.subr.bf16.mxu0 %v1190
        %1768 = vmatpush1.bf16.msra.mxu0 %v1189
        %1769 = vmatprep.subr.bf16.mxu0 %v1340
        %1770 = vmatpush2.bf16.msra.mxu0 %v1339
        %1771 = vmatprep.subr.bf16.mxu0 %v1330
        %1772 = vmatpush2.bf16.msra.mxu0 %v1329
        %1773 = vmatprep.subr.bf16.mxu0 %v1320
        %1774 = vmatpush2.bf16.msra.mxu0 %v1319
        %1775 = vmatprep.subr.bf16.mxu0 %v1310
        %1776 = vmatpush2.bf16.msra.mxu0 %v1309
        %1777 = vmatprep.subr.bf16.mxu0 %v1300
        %1778 = vmatpush2.bf16.msra.mxu0 %v1299
        %1779 = vmatprep.subr.bf16.mxu0 %v1290
        %1780 = vmatpush2.bf16.msra.mxu0 %v1289
        %1781 = vmatprep.subr.bf16.mxu0 %v1280
        %1782 = vmatpush2.bf16.msra.mxu0 %v1279
        %1783 = vmatprep.subr.bf16.mxu0 %v1270
        %1784 = vmatpush2.bf16.msra.mxu0 %v1269
        %1785 = vmatprep.mubr.bf16.mxu0 %v581
        %1786 = vmatmul.mubr.bf16.gmra.mxu0 %v580
        %v1787 = vpop.f32.mrf.mxu0
        %v1788 = vadd.f32 %v544, %v1787
        %v1789 = vpop.f32.mrf.mxu0
        %v1790 = vadd.f32 %v548, %v1789
        %v1791 = vpop.f32.mrf.mxu0
        %v1792 = vpop.f32.mrf.mxu0
        %1793 = vdwg.mxu0
        %1794 = vmatprep.subr.bf16.mxu0 0
        %1795 = vmatpush1.bf16.msra.mxu0 0
        %1796 = vmatprep.subr.bf16.mxu0 0
        %1797 = vmatpush1.bf16.msra.mxu0 0
        %1798 = vmatprep.subr.bf16.mxu0 0
        %1799 = vmatpush1.bf16.msra.mxu0 0
        %1800 = vmatprep.subr.bf16.mxu0 0
        %1801 = vmatpush1.bf16.msra.mxu0 0
        %1802 = vmatprep.subr.bf16.mxu0 %v1380
        %1803 = vmatpush1.bf16.msra.mxu0 %v1379
        %1804 = vmatprep.subr.bf16.mxu0 %v1370
        %1805 = vmatpush1.bf16.msra.mxu0 %v1369
        %1806 = vmatprep.subr.bf16.mxu0 %v1360
        %1807 = vmatpush1.bf16.msra.mxu0 %v1359
        %1808 = vmatprep.subr.bf16.mxu0 %v1350
        %1809 = vmatpush1.bf16.msra.mxu0 %v1349
        %1810 = vmatprep.subr.bf16.mxu0 0
        %1811 = vmatpush2.bf16.msra.mxu0 0
        %1812 = vmatprep.subr.bf16.mxu0 0
        %1813 = vmatpush2.bf16.msra.mxu0 0
        %1814 = vmatprep.subr.bf16.mxu0 0
        %1815 = vmatpush2.bf16.msra.mxu0 0
        %1816 = vmatprep.subr.bf16.mxu0 0
        %1817 = vmatpush2.bf16.msra.mxu0 0
        %1818 = vmatprep.subr.bf16.mxu0 0
        %1819 = vmatpush2.bf16.msra.mxu0 0
        %1820 = vmatprep.subr.bf16.mxu0 0
        %1821 = vmatpush2.bf16.msra.mxu0 0
        %1822 = vmatprep.subr.bf16.mxu0 0
        %1823 = vmatpush2.bf16.msra.mxu0 0
        %1824 = vmatprep.subr.bf16.mxu0 0
        %1825 = vmatpush2.bf16.msra.mxu0 0
        %1826 = vmatprep.mubr.bf16.mxu0 0
        %1827 = vmatmul.mubr.bf16.gmra.mxu0 %v1587
        %v1828 = vpop.f32.mrf.mxu0
        %v1829 = vadd.f32 %v1788, %v1828
        %v1830 = vpop.f32.mrf.mxu0
        %v1831 = vadd.f32 %v1790, %v1830
        %v1832 = vpop.f32.mrf.mxu0
        %v1833 = vpop.f32.mrf.mxu0
        %1834 = vdwg.mxu0
        %1835 = vmatprep.subr.bf16.mxu0 %v1262
        %1836 = vmatpush1.bf16.msra.mxu0 %v1261
        %1837 = vmatprep.subr.bf16.mxu0 %v1252
        %1838 = vmatpush1.bf16.msra.mxu0 %v1251
        %1839 = vmatprep.subr.bf16.mxu0 %v1242
        %1840 = vmatpush1.bf16.msra.mxu0 %v1241
        %1841 = vmatprep.subr.bf16.mxu0 %v1232
        %1842 = vmatpush1.bf16.msra.mxu0 %v1231
        %1843 = vmatprep.subr.bf16.mxu0 %v1222
        %1844 = vmatpush1.bf16.msra.mxu0 %v1221
        %1845 = vmatprep.subr.bf16.mxu0 %v1212
        %1846 = vmatpush1.bf16.msra.mxu0 %v1211
        %1847 = vmatprep.subr.bf16.mxu0 %v1202
        %1848 = vmatpush1.bf16.msra.mxu0 %v1201
        %1849 = vmatprep.subr.bf16.mxu0 %v1192
        %1850 = vmatpush1.bf16.msra.mxu0 %v1191
        %1851 = vmatprep.subr.bf16.mxu0 %v1342
        %1852 = vmatpush2.bf16.msra.mxu0 %v1341
        %1853 = vmatprep.subr.bf16.mxu0 %v1332
        %1854 = vmatpush2.bf16.msra.mxu0 %v1331
        %1855 = vmatprep.subr.bf16.mxu0 %v1322
        %1856 = vmatpush2.bf16.msra.mxu0 %v1321
        %1857 = vmatprep.subr.bf16.mxu0 %v1312
        %1858 = vmatpush2.bf16.msra.mxu0 %v1311
        %1859 = vmatprep.subr.bf16.mxu0 %v1302
        %1860 = vmatpush2.bf16.msra.mxu0 %v1301
        %1861 = vmatprep.subr.bf16.mxu0 %v1292
        %1862 = vmatpush2.bf16.msra.mxu0 %v1291
        %1863 = vmatprep.subr.bf16.mxu0 %v1282
        %1864 = vmatpush2.bf16.msra.mxu0 %v1281
        %1865 = vmatprep.subr.bf16.mxu0 %v1272
        %1866 = vmatpush2.bf16.msra.mxu0 %v1271
        %1867 = vmatprep.mubr.bf16.mxu0 %v581
        %1868 = vmatmul.mubr.bf16.gmra.mxu0 %v580
        %v1869 = vpop.f32.mrf.mxu0
        %v1870 = vadd.f32 %v552, %v1869
        %v1871 = vpop.f32.mrf.mxu0
        %v1872 = vadd.f32 %v556, %v1871
        %v1873 = vpop.f32.mrf.mxu0
        %v1874 = vpop.f32.mrf.mxu0
        %1875 = vdwg.mxu0
        %1876 = vmatprep.subr.bf16.mxu0 0
        %1877 = vmatpush1.bf16.msra.mxu0 0
        %1878 = vmatprep.subr.bf16.mxu0 0
        %1879 = vmatpush1.bf16.msra.mxu0 0
        %1880 = vmatprep.subr.bf16.mxu0 0
        %1881 = vmatpush1.bf16.msra.mxu0 0
        %1882 = vmatprep.subr.bf16.mxu0 0
        %1883 = vmatpush1.bf16.msra.mxu0 0
        %1884 = vmatprep.subr.bf16.mxu0 %v1382
        %1885 = vmatpush1.bf16.msra.mxu0 %v1381
        %1886 = vmatprep.subr.bf16.mxu0 %v1372
        %1887 = vmatpush1.bf16.msra.mxu0 %v1371
        %1888 = vmatprep.subr.bf16.mxu0 %v1362
        %1889 = vmatpush1.bf16.msra.mxu0 %v1361
        %1890 = vmatprep.subr.bf16.mxu0 %v1352
        %1891 = vmatpush1.bf16.msra.mxu0 %v1351
        %1892 = vmatprep.subr.bf16.mxu0 0
        %1893 = vmatpush2.bf16.msra.mxu0 0
        %1894 = vmatprep.subr.bf16.mxu0 0
        %1895 = vmatpush2.bf16.msra.mxu0 0
        %1896 = vmatprep.subr.bf16.mxu0 0
        %1897 = vmatpush2.bf16.msra.mxu0 0
        %1898 = vmatprep.subr.bf16.mxu0 0
        %1899 = vmatpush2.bf16.msra.mxu0 0
        %1900 = vmatprep.subr.bf16.mxu0 0
        %1901 = vmatpush2.bf16.msra.mxu0 0
        %1902 = vmatprep.subr.bf16.mxu0 0
        %1903 = vmatpush2.bf16.msra.mxu0 0
        %1904 = vmatprep.subr.bf16.mxu0 0
        %1905 = vmatpush2.bf16.msra.mxu0 0
        %1906 = vmatprep.subr.bf16.mxu0 0
        %1907 = vmatpush2.bf16.msra.mxu0 0
        %1908 = vmatprep.mubr.bf16.mxu0 0
        %1909 = vmatmul.mubr.bf16.gmra.mxu0 %v1587
        %v1910 = vpop.f32.mrf.mxu0
        %v1911 = vadd.f32 %v1870, %v1910
        %v1912 = vpop.f32.mrf.mxu0
        %v1913 = vadd.f32 %v1872, %v1912
        %v1914 = vpop.f32.mrf.mxu0
        %v1915 = vpop.f32.mrf.mxu0
        %1916 = vdwg.mxu0
        %1917 = vmatprep.subr.bf16.mxu0 %v1264
        %1918 = vmatpush1.bf16.msra.mxu0 %v1263
        %1919 = vmatprep.subr.bf16.mxu0 %v1254
        %1920 = vmatpush1.bf16.msra.mxu0 %v1253
        %1921 = vmatprep.subr.bf16.mxu0 %v1244
        %1922 = vmatpush1.bf16.msra.mxu0 %v1243
        %1923 = vmatprep.subr.bf16.mxu0 %v1234
        %1924 = vmatpush1.bf16.msra.mxu0 %v1233
        %1925 = vmatprep.subr.bf16.mxu0 %v1224
        %1926 = vmatpush1.bf16.msra.mxu0 %v1223
        %1927 = vmatprep.subr.bf16.mxu0 %v1214
        %1928 = vmatpush1.bf16.msra.mxu0 %v1213
        %1929 = vmatprep.subr.bf16.mxu0 %v1204
        %1930 = vmatpush1.bf16.msra.mxu0 %v1203
        %1931 = vmatprep.subr.bf16.mxu0 %v1194
        %1932 = vmatpush1.bf16.msra.mxu0 %v1193
        %1933 = vmatprep.subr.bf16.mxu0 %v1344
        %1934 = vmatpush2.bf16.msra.mxu0 %v1343
        %1935 = vmatprep.subr.bf16.mxu0 %v1334
        %1936 = vmatpush2.bf16.msra.mxu0 %v1333
        %1937 = vmatprep.subr.bf16.mxu0 %v1324
        %1938 = vmatpush2.bf16.msra.mxu0 %v1323
        %1939 = vmatprep.subr.bf16.mxu0 %v1314
        %1940 = vmatpush2.bf16.msra.mxu0 %v1313
        %1941 = vmatprep.subr.bf16.mxu0 %v1304
        %1942 = vmatpush2.bf16.msra.mxu0 %v1303
        %1943 = vmatprep.subr.bf16.mxu0 %v1294
        %1944 = vmatpush2.bf16.msra.mxu0 %v1293
        %1945 = vmatprep.subr.bf16.mxu0 %v1284
        %1946 = vmatpush2.bf16.msra.mxu0 %v1283
        %1947 = vmatprep.subr.bf16.mxu0 %v1274
        %1948 = vmatpush2.bf16.msra.mxu0 %v1273
        %1949 = vmatprep.mubr.bf16.mxu0 %v581
        %1950 = vmatmul.mubr.bf16.gmra.mxu0 %v580
        %v1951 = vpop.f32.mrf.mxu0
        %v1952 = vadd.f32 %v560, %v1951
        %v1953 = vpop.f32.mrf.mxu0
        %v1954 = vadd.f32 %v564, %v1953
        %v1955 = vpop.f32.mrf.mxu0
        %v1956 = vpop.f32.mrf.mxu0
        %1957 = vdwg.mxu0
        %1958 = vmatprep.subr.bf16.mxu0 0
        %1959 = vmatpush1.bf16.msra.mxu0 0
        %1960 = vmatprep.subr.bf16.mxu0 0
        %1961 = vmatpush1.bf16.msra.mxu0 0
        %1962 = vmatprep.subr.bf16.mxu0 0
        %1963 = vmatpush1.bf16.msra.mxu0 0
        %1964 = vmatprep.subr.bf16.mxu0 0
        %1965 = vmatpush1.bf16.msra.mxu0 0
        %1966 = vmatprep.subr.bf16.mxu0 %v1384
        %1967 = vmatpush1.bf16.msra.mxu0 %v1383
        %1968 = vmatprep.subr.bf16.mxu0 %v1374
        %1969 = vmatpush1.bf16.msra.mxu0 %v1373
        %1970 = vmatprep.subr.bf16.mxu0 %v1364
        %1971 = vmatpush1.bf16.msra.mxu0 %v1363
        %1972 = vmatprep.subr.bf16.mxu0 %v1354
        %1973 = vmatpush1.bf16.msra.mxu0 %v1353
        %1974 = vmatprep.subr.bf16.mxu0 0
        %1975 = vmatpush2.bf16.msra.mxu0 0
        %1976 = vmatprep.subr.bf16.mxu0 0
        %1977 = vmatpush2.bf16.msra.mxu0 0
        %1978 = vmatprep.subr.bf16.mxu0 0
        %1979 = vmatpush2.bf16.msra.mxu0 0
        %1980 = vmatprep.subr.bf16.mxu0 0
        %1981 = vmatpush2.bf16.msra.mxu0 0
        %1982 = vmatprep.subr.bf16.mxu0 0
        %1983 = vmatpush2.bf16.msra.mxu0 0
        %1984 = vmatprep.subr.bf16.mxu0 0
        %1985 = vmatpush2.bf16.msra.mxu0 0
        %1986 = vmatprep.subr.bf16.mxu0 0
        %1987 = vmatpush2.bf16.msra.mxu0 0
        %1988 = vmatprep.subr.bf16.mxu0 0
        %1989 = vmatpush2.bf16.msra.mxu0 0
        %1990 = vmatprep.mubr.bf16.mxu0 0
        %1991 = vmatmul.mubr.bf16.gmra.mxu0 %v1587
        %v1992 = vpop.f32.mrf.mxu0
        %v1993 = vadd.f32 %v1952, %v1992
        %v1994 = vpop.f32.mrf.mxu0
        %v1995 = vadd.f32 %v1954, %v1994
        %v1996 = vpop.f32.mrf.mxu0
        %v1997 = vpop.f32.mrf.mxu0
        %1998 = vdwg.mxu0
        %v1999 = vpack.c.bf16 %v1665, %v1665
        %v2000 = vpack.c.bf16 %v1667, %v1667
        %v2001 = vpack.c.bf16 %v1747, %v1747
        %v2002 = vpack.c.bf16 %v1749, %v1749
        %v2003 = vpack.c.bf16 %v1829, %v1829
        %v2004 = vpack.c.bf16 %v1831, %v1831
        %v2005 = vpack.c.bf16 %v1911, %v1911
        %v2006 = vpack.c.bf16 %v1913, %v1913
        %v2007 = vpack.c.bf16 %v1993, %v1993
        %v2008 = vpack.c.bf16 %v1995, %v1995
        %v2009 = vxor.u32 %v1999, 2147516416
        %v2010 = vxor.u32 %v2000, 2147516416
        %v2011 = vxor.u32 %v2001, 2147516416
        %v2012 = vxor.u32 %v2002, 2147516416
        %v2013 = vxor.u32 %v2003, 2147516416
        %v2014 = vxor.u32 %v2004, 2147516416
        %v2015 = vxor.u32 %v2005, 2147516416
        %v2016 = vxor.u32 %v2006, 2147516416
        %v2017 = vxor.u32 %v2007, 2147516416
        %v2018 = vxor.u32 %v2008, 2147516416
        %v2020 = vmul.bf16 %v2009, 1069105081
        %v2021 = vpow.bf16.pop %v2020
        %v2023 = vmul.bf16 %v2010, 1069105081
        %v2024 = vpow.bf16.pop %v2023
        %v2026 = vmul.bf16 %v2011, 1069105081
        %v2027 = vpow.bf16.pop %v2026
        %v2029 = vmul.bf16 %v2012, 1069105081
        %v2030 = vpow.bf16.pop %v2029
        %v2032 = vmul.bf16 %v2013, 1069105081
        %v2033 = vpow.bf16.pop %v2032
        %v2035 = vmul.bf16 %v2014, 1069105081
        %v2036 = vpow.bf16.pop %v2035
        %v2038 = vmul.bf16 %v2015, 1069105081
        %v2039 = vpow.bf16.pop %v2038
        %v2041 = vmul.bf16 %v2016, 1069105081
        %v2042 = vpow.bf16.pop %v2041
        %v2044 = vmul.bf16 %v2017, 1069105081
        %v2045 = vpow.bf16.pop %v2044
        %v2047 = vmul.bf16 %v2018, 1069105081
        %v2048 = vpow.bf16.pop %v2047
        %v2049 = vadd.bf16 %v2021, 1065369472
        %v2050 = vadd.bf16 %v2024, 1065369472
        %v2051 = vadd.bf16 %v2027, 1065369472
        %v2052 = vadd.bf16 %v2030, 1065369472
        %v2053 = vadd.bf16 %v2033, 1065369472
        %v2054 = vadd.bf16 %v2036, 1065369472
        %v2055 = vadd.bf16 %v2039, 1065369472
        %v2056 = vadd.bf16 %v2042, 1065369472
        %v2057 = vadd.bf16 %v2045, 1065369472
        %v2058 = vadd.bf16 %v2048, 1065369472
        %v2059 = vrcp.bf16.pop %v2049
        %v2060 = vmul.bf16 1065369472, %v2059
        %v2061 = vrcp.bf16.pop %v2050
        %v2062 = vmul.bf16 1065369472, %v2061
        %v2063 = vrcp.bf16.pop %v2051
        %v2064 = vmul.bf16 1065369472, %v2063
        %v2065 = vrcp.bf16.pop %v2052
        %v2066 = vmul.bf16 1065369472, %v2065
        %v2067 = vrcp.bf16.pop %v2053
        %v2068 = vmul.bf16 1065369472, %v2067
        %v2069 = vrcp.bf16.pop %v2054
        %v2070 = vmul.bf16 1065369472, %v2069
        %v2071 = vrcp.bf16.pop %v2055
        %v2072 = vmul.bf16 1065369472, %v2071
        %v2073 = vrcp.bf16.pop %v2056
        %v2074 = vmul.bf16 1065369472, %v2073
        %v2075 = vrcp.bf16.pop %v2057
        %v2076 = vmul.bf16 1065369472, %v2075
        %v2077 = vrcp.bf16.pop %v2058
        %v2078 = vmul.bf16 1065369472, %v2077
        %v2079 = vmul.bf16 %v1999, %v2060
        %v2080 = vmul.bf16 %v2000, %v2062
        %v2081 = vmul.bf16 %v2001, %v2064
        %v2082 = vmul.bf16 %v2002, %v2066
        %v2083 = vmul.bf16 %v2003, %v2068
        %v2084 = vmul.bf16 %v2004, %v2070
        %v2085 = vmul.bf16 %v2005, %v2072
        %v2086 = vmul.bf16 %v2006, %v2074
        %v2087 = vmul.bf16 %v2007, %v2076
        %v2088 = vmul.bf16 %v2008, %v2078
        %v2089 = vlaneseq
        %v2090 = vshrl.u32 %v2089, 7
        %v2091 = vld [vmem:[%s262] sm:$0x1]
        %v2092 = vlaneseq
        %v2093 = vshrl.u32 %v2092, 7
        %v2094 = vsub.s32 0, %v2093
        %v2095 = vrot.slane %v2091, %v2094
        %vm2096 = vcmp.eq.s32.totalorder %v2095, %v2090
        %v2097 = vsel %vm2096, 1, 0
        %v2098 = vcvt.s32.f32 %v2097
        %v2099 = vpack.c.bf16 %v2098, %v2098
        %v2100 = vld [vmem:[%s298] sm:$0xff]
        %v2101 = vld [vmem:[%s298 + $0x8] sm:$0xff]
        %v2102 = vld [vmem:[%s298 + $0x10] sm:$0xff]
        %v2103 = vld [vmem:[%s298 + $0x18] sm:$0xff]
        %v2104 = vld [vmem:[%s298 + $0x20] sm:$0xff]
        %v2105 = vld [vmem:[%s298 + $0x28] sm:$0xff]
        %v2106 = vld [vmem:[%s298 + $0x30] sm:$0xff]
        %v2107 = vld [vmem:[%s298 + $0x38] sm:$0xff]
        %v2108 = vld [vmem:[%s298 + $0x40] sm:$0xff]
        %v2109 = vld [vmem:[%s298 + $0x48] sm:$0xff]
        %vm2110 = vcmask 64512
        %v2112 = vsel %vm2110, %v2099, 0
        %vm2114 = vcmask 1043456
        %v2116 = vsel %vm2114, %v2079, 0
        %v2119 = vsel %vm2114, %v2080, 0
        %v2122 = vsel %vm2114, %v2081, 0
        %v2125 = vsel %vm2114, %v2082, 0
        %v2128 = vsel %vm2114, %v2083, 0
        %v2131 = vsel %vm2114, %v2084, 0
        %v2134 = vsel %vm2114, %v2085, 0
        %v2137 = vsel %vm2114, %v2086, 0
        %v2140 = vsel %vm2114, %v2087, 0
        %v2143 = vsel %vm2114, %v2088, 0
        %2145 = vmatprep.subr.bf16.mxu0 0
        %2146 = vmatpush1.bf16.msra.mxu0 0
        %2147 = vmatprep.subr.bf16.mxu0 0
        %2148 = vmatpush1.bf16.msra.mxu0 0
        %2149 = vmatprep.subr.bf16.mxu0 0
        %2150 = vmatpush1.bf16.msra.mxu0 0
        %2151 = vmatprep.subr.bf16.mxu0 0
        %2152 = vmatpush1.bf16.msra.mxu0 0
        %2153 = vmatprep.subr.bf16.mxu0 0
        %2154 = vmatpush1.bf16.msra.mxu0 0
        %2155 = vmatprep.subr.bf16.mxu0 0
        %2156 = vmatpush1.bf16.msra.mxu0 0
        %2157 = vmatprep.subr.bf16.mxu0 0
        %2158 = vmatpush1.bf16.msra.mxu0 0
        %2159 = vmatprep.subr.bf16.mxu0 %v2119
        %2160 = vmatpush1.bf16.msra.mxu0 %v2116
        %2161 = vmatprep.subr.bf16.mxu0 0
        %2162 = vmatpush2.bf16.msra.mxu0 0
        %2163 = vmatprep.subr.bf16.mxu0 0
        %2164 = vmatpush2.bf16.msra.mxu0 0
        %2165 = vmatprep.subr.bf16.mxu0 0
        %2166 = vmatpush2.bf16.msra.mxu0 0
        %2167 = vmatprep.subr.bf16.mxu0 0
        %2168 = vmatpush2.bf16.msra.mxu0 0
        %2169 = vmatprep.subr.bf16.mxu0 0
        %2170 = vmatpush2.bf16.msra.mxu0 0
        %2171 = vmatprep.subr.bf16.mxu0 0
        %2172 = vmatpush2.bf16.msra.mxu0 0
        %2173 = vmatprep.subr.bf16.mxu0 0
        %2174 = vmatpush2.bf16.msra.mxu0 0
        %2175 = vmatprep.subr.bf16.mxu0 0
        %2176 = vmatpush2.bf16.msra.mxu0 0
        %2177 = vmatprep.mubr.bf16.mxu0 0
        %2178 = vmatmul.mubr.bf16.gmra.mxu0 %v2112
        %v2179 = vpop.f32.mrf.mxu0
        %v2180 = vadd.f32 0.0, %v2179
        %v2181 = vpop.f32.mrf.mxu0
        %v2182 = vadd.f32 0.0, %v2181
        %v2183 = vpop.f32.mrf.mxu0
        %v2184 = vpop.f32.mrf.mxu0
        %2185 = vdwg.mxu0
        %2186 = vmatprep.subr.bf16.mxu0 0
        %2187 = vmatpush1.bf16.msra.mxu0 0
        %2188 = vmatprep.subr.bf16.mxu0 0
        %2189 = vmatpush1.bf16.msra.mxu0 0
        %2190 = vmatprep.subr.bf16.mxu0 0
        %2191 = vmatpush1.bf16.msra.mxu0 0
        %2192 = vmatprep.subr.bf16.mxu0 0
        %2193 = vmatpush1.bf16.msra.mxu0 0
        %2194 = vmatprep.subr.bf16.mxu0 0
        %2195 = vmatpush1.bf16.msra.mxu0 0
        %2196 = vmatprep.subr.bf16.mxu0 0
        %2197 = vmatpush1.bf16.msra.mxu0 0
        %2198 = vmatprep.subr.bf16.mxu0 0
        %2199 = vmatpush1.bf16.msra.mxu0 0
        %2200 = vmatprep.subr.bf16.mxu0 %v2125
        %2201 = vmatpush1.bf16.msra.mxu0 %v2122
        %2202 = vmatprep.subr.bf16.mxu0 0
        %2203 = vmatpush2.bf16.msra.mxu0 0
        %2204 = vmatprep.subr.bf16.mxu0 0
        %2205 = vmatpush2.bf16.msra.mxu0 0
        %2206 = vmatprep.subr.bf16.mxu0 0
        %2207 = vmatpush2.bf16.msra.mxu0 0
        %2208 = vmatprep.subr.bf16.mxu0 0
        %2209 = vmatpush2.bf16.msra.mxu0 0
        %2210 = vmatprep.subr.bf16.mxu0 0
        %2211 = vmatpush2.bf16.msra.mxu0 0
        %2212 = vmatprep.subr.bf16.mxu0 0
        %2213 = vmatpush2.bf16.msra.mxu0 0
        %2214 = vmatprep.subr.bf16.mxu0 0
        %2215 = vmatpush2.bf16.msra.mxu0 0
        %2216 = vmatprep.subr.bf16.mxu0 0
        %2217 = vmatpush2.bf16.msra.mxu0 0
        %2218 = vmatprep.mubr.bf16.mxu0 0
        %2219 = vmatmul.mubr.bf16.gmra.mxu0 %v2112
        %v2220 = vpop.f32.mrf.mxu0
        %v2221 = vadd.f32 0.0, %v2220
        %v2222 = vpop.f32.mrf.mxu0
        %v2223 = vadd.f32 0.0, %v2222
        %v2224 = vpop.f32.mrf.mxu0
        %v2225 = vpop.f32.mrf.mxu0
        %2226 = vdwg.mxu0
        %2227 = vmatprep.subr.bf16.mxu0 0
        %2228 = vmatpush1.bf16.msra.mxu0 0
        %2229 = vmatprep.subr.bf16.mxu0 0
        %2230 = vmatpush1.bf16.msra.mxu0 0
        %2231 = vmatprep.subr.bf16.mxu0 0
        %2232 = vmatpush1.bf16.msra.mxu0 0
        %2233 = vmatprep.subr.bf16.mxu0 0
        %2234 = vmatpush1.bf16.msra.mxu0 0
        %2235 = vmatprep.subr.bf16.mxu0 0
        %2236 = vmatpush1.bf16.msra.mxu0 0
        %2237 = vmatprep.subr.bf16.mxu0 0
        %2238 = vmatpush1.bf16.msra.mxu0 0
        %2239 = vmatprep.subr.bf16.mxu0 0
        %2240 = vmatpush1.bf16.msra.mxu0 0
        %2241 = vmatprep.subr.bf16.mxu0 %v2131
        %2242 = vmatpush1.bf16.msra.mxu0 %v2128
        %2243 = vmatprep.subr.bf16.mxu0 0
        %2244 = vmatpush2.bf16.msra.mxu0 0
        %2245 = vmatprep.subr.bf16.mxu0 0
        %2246 = vmatpush2.bf16.msra.mxu0 0
        %2247 = vmatprep.subr.bf16.mxu0 0
        %2248 = vmatpush2.bf16.msra.mxu0 0
        %2249 = vmatprep.subr.bf16.mxu0 0
        %2250 = vmatpush2.bf16.msra.mxu0 0
        %2251 = vmatprep.subr.bf16.mxu0 0
        %2252 = vmatpush2.bf16.msra.mxu0 0
        %2253 = vmatprep.subr.bf16.mxu0 0
        %2254 = vmatpush2.bf16.msra.mxu0 0
        %2255 = vmatprep.subr.bf16.mxu0 0
        %2256 = vmatpush2.bf16.msra.mxu0 0
        %2257 = vmatprep.subr.bf16.mxu0 0
        %2258 = vmatpush2.bf16.msra.mxu0 0
        %2259 = vmatprep.mubr.bf16.mxu0 0
        %2260 = vmatmul.mubr.bf16.gmra.mxu0 %v2112
        %v2261 = vpop.f32.mrf.mxu0
        %v2262 = vadd.f32 0.0, %v2261
        %v2263 = vpop.f32.mrf.mxu0
        %v2264 = vadd.f32 0.0, %v2263
        %v2265 = vpop.f32.mrf.mxu0
        %v2266 = vpop.f32.mrf.mxu0
        %2267 = vdwg.mxu0
        %2268 = vmatprep.subr.bf16.mxu0 0
        %2269 = vmatpush1.bf16.msra.mxu0 0
        %2270 = vmatprep.subr.bf16.mxu0 0
        %2271 = vmatpush1.bf16.msra.mxu0 0
        %2272 = vmatprep.subr.bf16.mxu0 0
        %2273 = vmatpush1.bf16.msra.mxu0 0
        %2274 = vmatprep.subr.bf16.mxu0 0
        %2275 = vmatpush1.bf16.msra.mxu0 0
        %2276 = vmatprep.subr.bf16.mxu0 0
        %2277 = vmatpush1.bf16.msra.mxu0 0
        %2278 = vmatprep.subr.bf16.mxu0 0
        %2279 = vmatpush1.bf16.msra.mxu0 0
        %2280 = vmatprep.subr.bf16.mxu0 0
        %2281 = vmatpush1.bf16.msra.mxu0 0
        %2282 = vmatprep.subr.bf16.mxu0 %v2137
        %2283 = vmatpush1.bf16.msra.mxu0 %v2134
        %2284 = vmatprep.subr.bf16.mxu0 0
        %2285 = vmatpush2.bf16.msra.mxu0 0
        %2286 = vmatprep.subr.bf16.mxu0 0
        %2287 = vmatpush2.bf16.msra.mxu0 0
        %2288 = vmatprep.subr.bf16.mxu0 0
        %2289 = vmatpush2.bf16.msra.mxu0 0
        %2290 = vmatprep.subr.bf16.mxu0 0
        %2291 = vmatpush2.bf16.msra.mxu0 0
        %2292 = vmatprep.subr.bf16.mxu0 0
        %2293 = vmatpush2.bf16.msra.mxu0 0
        %2294 = vmatprep.subr.bf16.mxu0 0
        %2295 = vmatpush2.bf16.msra.mxu0 0
        %2296 = vmatprep.subr.bf16.mxu0 0
        %2297 = vmatpush2.bf16.msra.mxu0 0
        %2298 = vmatprep.subr.bf16.mxu0 0
        %2299 = vmatpush2.bf16.msra.mxu0 0
        %2300 = vmatprep.mubr.bf16.mxu0 0
        %2301 = vmatmul.mubr.bf16.gmra.mxu0 %v2112
        %v2302 = vpop.f32.mrf.mxu0
        %v2303 = vadd.f32 0.0, %v2302
        %v2304 = vpop.f32.mrf.mxu0
        %v2305 = vadd.f32 0.0, %v2304
        %v2306 = vpop.f32.mrf.mxu0
        %v2307 = vpop.f32.mrf.mxu0
        %2308 = vdwg.mxu0
        %2309 = vmatprep.subr.bf16.mxu0 0
        %2310 = vmatpush1.bf16.msra.mxu0 0
        %2311 = vmatprep.subr.bf16.mxu0 0
        %2312 = vmatpush1.bf16.msra.mxu0 0
        %2313 = vmatprep.subr.bf16.mxu0 0
        %2314 = vmatpush1.bf16.msra.mxu0 0
        %2315 = vmatprep.subr.bf16.mxu0 0
        %2316 = vmatpush1.bf16.msra.mxu0 0
        %2317 = vmatprep.subr.bf16.mxu0 0
        %2318 = vmatpush1.bf16.msra.mxu0 0
        %2319 = vmatprep.subr.bf16.mxu0 0
        %2320 = vmatpush1.bf16.msra.mxu0 0
        %2321 = vmatprep.subr.bf16.mxu0 0
        %2322 = vmatpush1.bf16.msra.mxu0 0
        %2323 = vmatprep.subr.bf16.mxu0 %v2143
        %2324 = vmatpush1.bf16.msra.mxu0 %v2140
        %2325 = vmatprep.subr.bf16.mxu0 0
        %2326 = vmatpush2.bf16.msra.mxu0 0
        %2327 = vmatprep.subr.bf16.mxu0 0
        %2328 = vmatpush2.bf16.msra.mxu0 0
        %2329 = vmatprep.subr.bf16.mxu0 0
        %2330 = vmatpush2.bf16.msra.mxu0 0
        %2331 = vmatprep.subr.bf16.mxu0 0
        %2332 = vmatpush2.bf16.msra.mxu0 0
        %2333 = vmatprep.subr.bf16.mxu0 0
        %2334 = vmatpush2.bf16.msra.mxu0 0
        %2335 = vmatprep.subr.bf16.mxu0 0
        %2336 = vmatpush2.bf16.msra.mxu0 0
        %2337 = vmatprep.subr.bf16.mxu0 0
        %2338 = vmatpush2.bf16.msra.mxu0 0
        %2339 = vmatprep.subr.bf16.mxu0 0
        %2340 = vmatpush2.bf16.msra.mxu0 0
        %2341 = vmatprep.mubr.bf16.mxu0 0
        %2342 = vmatmul.mubr.bf16.gmra.mxu0 %v2112
        %v2343 = vpop.f32.mrf.mxu0
        %v2344 = vadd.f32 0.0, %v2343
        %v2345 = vpop.f32.mrf.mxu0
        %v2346 = vadd.f32 0.0, %v2345
        %v2347 = vpop.f32.mrf.mxu0
        %v2348 = vpop.f32.mrf.mxu0
        %2349 = vdwg.mxu0
        %v2350 = vadd.f32 %v2100, %v2180
        %v2351 = vadd.f32 %v2101, %v2182
        %v2352 = vadd.f32 %v2102, %v2221
        %v2353 = vadd.f32 %v2103, %v2223
        %v2354 = vadd.f32 %v2104, %v2262
        %v2355 = vadd.f32 %v2105, %v2264
        %v2356 = vadd.f32 %v2106, %v2303
        %v2357 = vadd.f32 %v2107, %v2305
        %v2358 = vadd.f32 %v2108, %v2344
        %v2359 = vadd.f32 %v2109, %v2346
        %2360 = vst [vmem:[%s298] sm:$0xff] %v2350
        %2361 = vst [vmem:[%s298 + $0x8] sm:$0xff] %v2351
        %2362 = vst [vmem:[%s298 + $0x10] sm:$0xff] %v2352
        %2363 = vst [vmem:[%s298 + $0x18] sm:$0xff] %v2353
        %2364 = vst [vmem:[%s298 + $0x20] sm:$0xff] %v2354
        %2365 = vst [vmem:[%s298 + $0x28] sm:$0xff] %v2355
        %2366 = vst [vmem:[%s298 + $0x30] sm:$0xff] %v2356
        %2367 = vst [vmem:[%s298 + $0x38] sm:$0xff] %v2357
        %2368 = vst [vmem:[%s298 + $0x40] sm:$0xff] %v2358
        %2369 = vst [vmem:[%s298 + $0x48] sm:$0xff] %v2359
        %s2370 = sand.u32 %s147, 1
        %s2371 = scalar_lea.sflag [#allocation4], %s2370
        %s2372 = sand.u32 %s147, 1
        %s2373 = smul.addr %s2372, 80
        %s2374 = scalar_lea.vmem [#allocation10], %s2373
        // Predicated region
        $region57: #{tpu_custom_call.1} parent=35 // pred_check
          %p2375 = pneg %p157
        $region58: #{tpu_custom_call.1} parent=35 // pred_check_branch
          %2377 = sbr.rel (%p2375) target = $region60
        $region59: #{tpu_custom_call.1} parent=35 // pred_region
          %s2379 = ssub.s32 1280, 1280
          %2380 = vsyncadd %s2371, %s2379
          %s2381 = smul.addr %s29, 10
          %s2382 = smul.addr %s2381, 128
          %s2383 = scalar_lea.hbm %s4, %s2382
          %s2385 = sshll.u32 %s2374, 4
          %s2386 = int_to_ptr.vmem [resolvable:$true] %s2385
          %2388 = dma.vmem_to_hbm [thread:$0]  %s2386, 1280, %s2383, %s2371
        $region60: #{tpu_custom_call.1} parent=35 // pred_fallthru
          _
      $region36: #{tpu_custom_call.1} parent=5 // pred_fallthru
        _
      %p2389 = scmp.le.s32.totalorder 2, %s20
      // Predicated region
      $region61: #{tpu_custom_call.1} parent=5 // pred_check
        %p2390 = pneg %p2389
      $region62: #{tpu_custom_call.1} parent=5 // pred_check_branch
        %2392 = sbr.rel (%p2390) target = $region64
      $region63: #{tpu_custom_call.1} parent=5 // pred_region
        %s2393 = ssub.s32 %s20, 2
        // Predicated region
        $region65: #{tpu_custom_call.1} parent=63 // pred_check
          %p2394 = pneg %p163
        $region66: #{tpu_custom_call.1} parent=63 // pred_check_branch
          %2396 = sbr.rel (%p2394) target = $region68
        $region67: #{tpu_custom_call.1} parent=63 // pred_region
          %s2397 = sand.u32 %s148, 1
          %s2398 = scalar_lea.sflag [#allocation4], %s2397
          %s2399 = sand.u32 %s148, 1
          %s2400 = smul.addr %s2399, 80
          %s2401 = scalar_lea.vmem [#allocation10], %s2400
          %2402 = dma.done %s2398, 1280
        $region68: #{tpu_custom_call.1} parent=63 // pred_fallthru
          _
      $region64: #{tpu_custom_call.1} parent=5 // pred_fallthru
        _
    $region6: #{tpu_custom_call.1} parent=1 // loop_footer
      %s24 = sadd.s32 1, %s20
    $region7: #{tpu_custom_call.1} parent=1 // loop_footer_branch
      %19 = sbr.rel target = $region3
    $region8: #{tpu_custom_call.1} parent=1 // loop_exit
      _
    %2403 = vsyncpa [#allocation3], 1
    %s2404 = scalar_lea.sflag [#allocation3], 1
    %2405 = vsyncpa %s2404, 1
    %2406 = vsyncpa [#allocation6], 1
    %s2407 = scalar_lea.sflag [#allocation6], 1
    %2408 = vsyncpa %s2407, 1
    %2409 = vsyncpa [#allocation9], 1
    %2410 = vsyncpa [#allocation4], 1
    %s2411 = scalar_lea.sflag [#allocation4], 1
    %2412 = vsyncpa %s2411, 1

</llo_original>
